<compile_context>
chip_gen: v5e
topology: v5e:2x2
jax: 0.10.0
libtpu: 0.0.40
codegen_flags: <defaults>
</compile_context>

<pallas_src>
import jax
import jax.numpy as jnp
from jax.experimental import pallas as pl
from jax.experimental.pallas import tpu as pltpu


LOG_STD_MIN = -20.0
LOG_STD_MAX = 2.0


def _round_up(x, m):
    return ((x + m - 1) // m) * m


# --------------------------------------------------------------------------
# Kernel: three dense matmuls + bias/relu + fused-head clip, all lane-dense.
# --------------------------------------------------------------------------
def _fcgp_kernel(x_ref, w1_ref, b1_ref, w2_ref, b2_ref, wh_ref, bh_ref,
                 lo_ref, hi_ref, out_ref):
    cdt = w1_ref.dtype                       # bf16 (fast path) or f32 (exact path)

    # layer 1: relu(x @ W1_blk + b1)   (f32 accumulate on the MXU)
    h = jnp.dot(x_ref[...].astype(cdt), w1_ref[...],
                preferred_element_type=jnp.float32)
    h = jnp.maximum(h + b1_ref[...], 0.0)

    # layer 2: relu(h @ W2_blk + b2)
    h = jnp.dot(h.astype(cdt), w2_ref[...], preferred_element_type=jnp.float32)
    h = jnp.maximum(h + b2_ref[...], 0.0)

    # fused heads: [mean | log_std] per 2A-lane group, 16 groups per row.
    heads = jnp.dot(h.astype(cdt), wh_ref[...], preferred_element_type=jnp.float32)
    heads = heads + bh_ref[...]

    # per-lane clip: mean lanes get (-inf, +inf), log_std lanes get the clamp.
    out_ref[...] = jnp.clip(heads, lo_ref[...], hi_ref[...]).astype(out_ref.dtype)


# --------------------------------------------------------------------------
# One-time (hoisted) weight preparation.
# --------------------------------------------------------------------------
def prepare_fcgp_params(params, *, fold=16, use_bf16=True):
    """Fuse the two heads and expand all weights to block-diagonal 'folded' form.

    params: w1 (D,H1), b1 (1,H1), w2 (H1,H2), b2 (1,H2),
            wm (H2,A), bm (1,A), ws (H2,A), bs (1,A)   -- all (in, out) layout.
    Returns a dict of arrays ready for fcgp_forward (call once, reuse)."""
    cdtype = jnp.bfloat16 if use_bf16 else jnp.float32
    A = params["wm"].shape[1]

    wh = jnp.concatenate([params["wm"], params["ws"]], axis=1)   # (H2, 2A)
    bh = jnp.concatenate([params["bm"], params["bs"]], axis=1)   # (1, 2A)

    eye = jnp.eye(fold, dtype=jnp.float32)

    def blkdiag(w):                       # (din, dout) -> (fold*din, fold*dout)
        return jnp.kron(eye, w.astype(jnp.float32)).astype(cdtype)

    def tile_bias(b):                     # (1, dout) -> (1, fold*dout), f32
        return jnp.tile(b.astype(jnp.float32), (1, fold))

    lo_row = jnp.concatenate([jnp.full((A,), -jnp.inf, jnp.float32),
                              jnp.full((A,), LOG_STD_MIN, jnp.float32)])
    hi_row = jnp.concatenate([jnp.full((A,), jnp.inf, jnp.float32),
                              jnp.full((A,), LOG_STD_MAX, jnp.float32)])

    return {
        "w1": blkdiag(params["w1"]), "b1": tile_bias(params["b1"]),
        "w2": blkdiag(params["w2"]), "b2": tile_bias(params["b2"]),
        "wh": blkdiag(wh),           "bh": tile_bias(bh),
        "lo": jnp.tile(lo_row[None, :], (1, fold)),
        "hi": jnp.tile(hi_row[None, :], (1, fold)),
    }


# --------------------------------------------------------------------------
# Forward wrapper (jit the whole thing so everything around pallas_call fuses).
# --------------------------------------------------------------------------
def fcgp_forward(x, prep, *, tile_b=32768, out_dtype=jnp.float32,
                 vmem_limit_bytes=48 * 1024 * 1024):
    """Pallas equivalent of FCGP.forward.

    x:    (B, input_dim) float32 (a 1-D state gets a batch dim, like _format).
    prep: output of prepare_fcgp_params.
    returns (mean (B, A), log_std (B, A)) in out_dtype."""
    if x.ndim == 1:
        x = x[None, :]
    B, D = x.shape

    FD, FH1 = prep["w1"].shape
    FH2 = prep["w2"].shape[1]
    FO = prep["wh"].shape[1]
    fold = FD // D
    A = FO // (2 * fold)

    # ---- batch tiling: big tiles, bounded padding, >=2 (even) steps when it matters.
    Bg = -(-B // fold)                                   # folded rows needed
    # conservative per-folded-row VMEM cost: double-buffered x/out tiles (f32)
    # + f32 and bf16 hidden activations.
    row_bytes = 8 * (FD + FO) + 6 * (FH1 + FH2)
    static_bytes = 2 * sum(int(v.size) * v.dtype.itemsize for v in prep.values())
    budget = max(1 << 20, vmem_limit_bytes - static_bytes - (8 << 20))
    tbg_cap = max(8, (budget // row_bytes) // 8 * 8)
    tbg_max = max(8, min(max(tile_b // fold, 8), tbg_cap))

    n_steps = -(-Bg // tbg_max)
    if n_steps == 1 and Bg > 16:
        n_steps = 2                      # let v7x shard the batch over both TCs
    if n_steps > 1 and (n_steps % 2):
        n_steps += 1                     # even step count for clean 2-TC sharding
    TBg = _round_up(-(-Bg // n_steps), 8)
    Bg_pad = n_steps * TBg
    B_pad = Bg_pad * fold

    if B_pad != B:
        x = jnp.pad(x, ((0, B_pad - B), (0, 0)))
    x_fold = x.reshape(Bg_pad, fold * D)                 # free row-major reshape

    const = lambda i: (0, 0)
    in_specs = [
        pl.BlockSpec((TBg, FD), lambda i: (i, 0)),       # x: tiled over batch
        pl.BlockSpec(prep["w1"].shape, const),           # weights/biases resident
        pl.BlockSpec(prep["b1"].shape, const),
        pl.BlockSpec(prep["w2"].shape, const),
        pl.BlockSpec(prep["b2"].shape, const),
        pl.BlockSpec(prep["wh"].shape, const),
        pl.BlockSpec(prep["bh"].shape, const),
        pl.BlockSpec(prep["lo"].shape, const),
        pl.BlockSpec(prep["hi"].shape, const),
    ]
    out_specs = pl.BlockSpec((TBg, FO), lambda i: (i, 0))
    out_shape = jax.ShapeDtypeStruct((Bg_pad, FO), out_dtype)

    out = pl.pallas_call(
        _fcgp_kernel,
        out_shape=out_shape,
        grid=(n_steps,),
        in_specs=in_specs,
        out_specs=out_specs,
        compiler_params=pltpu.CompilerParams(
            dimension_semantics=("parallel",),
            vmem_limit_bytes=int(vmem_limit_bytes)),
    )(x_fold, prep["w1"], prep["b1"], prep["w2"], prep["b2"],
      prep["wh"], prep["bh"], prep["lo"], prep["hi"])

    out = out.reshape(B_pad, 2 * A)[:B]                  # free reshape + drop padding
    return out[:, :A], out[:, A:]


fcgp_forward_jit = jax.jit(
    fcgp_forward, static_argnames=("tile_b", "out_dtype", "vmem_limit_bytes"))


# --------------------------------------------------------------------------
# Synthetic init + pure-JAX reference (for correctness checks).
# --------------------------------------------------------------------------
def init_fcgp_params(key, input_dim, hidden_dims, action_dim):
    """PyTorch-Linear-like uniform fan-in init; weights stored (in, out)."""
    dims_in = [input_dim, hidden_dims[0], hidden_dims[-1], hidden_dims[-1]]
    dims_out = [hidden_dims[0], hidden_dims[1], action_dim, action_dim]
    names = ["1", "2", "m", "s"]
    params = {}
    for name, din, dout in zip(names, dims_in, dims_out):
        key, kw, kb = jax.random.split(key, 3)
        bound = 1.0 / jnp.sqrt(din)
        params[f"w{name}"] = jax.random.uniform(kw, (din, dout), jnp.float32, -bound, bound)
        params[f"b{name}"] = jax.random.uniform(kb, (1, dout), jnp.float32, -bound, bound)
    return params


def _reference_forward(x, params):
    h = jnp.maximum(x @ params["w1"] + params["b1"], 0.0)
    h = jnp.maximum(h @ params["w2"] + params["b2"], 0.0)
    mean = h @ params["wm"] + params["bm"]
    log_std = jnp.clip(h @ params["ws"] + params["bs"], LOG_STD_MIN, LOG_STD_MAX)
    return mean, log_std


# TODO(synk): full_pass / action sampling (Normal rsample, tanh rescale, alpha
# optimizer) are outside forward() and not implemented here.

if __name__ == "__main__":
    # FCGP(input_dim=16, action_bounds=([-1]*4, [1]*4), hidden_dims=(32, 32))
    batch, input_dim, hidden_dims, action_dim = 8, 16, (32, 32), 4

    key = jax.random.PRNGKey(0)
    key, kx, kb = jax.random.split(key, 3)
    x = jax.random.normal(kx, (batch, input_dim), jnp.float32)
    params = init_fcgp_params(key, input_dim, hidden_dims, action_dim)

    # One-time, hoisted weight prep (fast bf16 path and exact f32 path).
    prep_bf16 = prepare_fcgp_params(params, fold=16, use_bf16=True)
    prep_f32 = prepare_fcgp_params(params, fold=16, use_bf16=False)

    ref_mean, ref_ls = _reference_forward(x, params)

    # bf16-compute / f32-accumulate fast path
    mean, log_std = fcgp_forward_jit(x, prep_bf16)
    jax.block_until_ready((mean, log_std))
    assert mean.shape == (batch, action_dim) and log_std.shape == (batch, action_dim)
    assert bool(jnp.all(log_std >= LOG_STD_MIN)) and bool(jnp.all(log_std <= LOG_STD_MAX))
    assert jnp.allclose(mean, ref_mean, atol=5e-2, rtol=5e-2)
    assert jnp.allclose(log_std, ref_ls, atol=5e-2, rtol=5e-2)

    # f32 exact path
    mean32, log_std32 = fcgp_forward_jit(x, prep_f32)
    jax.block_until_ready((mean32, log_std32))
    assert jnp.allclose(mean32, ref_mean, atol=1e-4)
    assert jnp.allclose(log_std32, ref_ls, atol=1e-4)

    # ragged batch (exercises fold padding)
    x5 = x[:5]
    m5, ls5 = fcgp_forward_jit(x5, prep_f32)
    jax.block_until_ready((m5, ls5))
    rm5, rls5 = _reference_forward(x5, params)
    assert m5.shape == (5, action_dim) and ls5.shape == (5, action_dim)
    assert jnp.allclose(m5, rm5, atol=1e-4) and jnp.allclose(ls5, rls5, atol=1e-4)

    # larger batch (exercises the multi-step, 2-TC-shardable grid + bounded padding)
    x_big = jax.random.normal(kb, (300, input_dim), jnp.float32)
    mb, lsb = fcgp_forward_jit(x_big, prep_f32)
    jax.block_until_ready((mb, lsb))
    rmb, rlsb = _reference_forward(x_big, params)
    assert mb.shape == (300, action_dim)
    assert jnp.allclose(mb, rmb, atol=1e-4) and jnp.allclose(lsb, rlsb, atol=1e-4)

    # optional bf16 output (review item 9): same compute, half the output bytes
    mbf, lsbf = fcgp_forward_jit(x, prep_f32, out_dtype=jnp.bfloat16)
    jax.block_until_ready((mbf, lsbf))
    assert mbf.dtype == jnp.bfloat16 and lsbf.dtype == jnp.bfloat16
    assert bool(jnp.all(lsbf.astype(jnp.float32) >= LOG_STD_MIN - 1e-3))
    assert bool(jnp.all(lsbf.astype(jnp.float32) <= LOG_STD_MAX + 1e-3))
    assert jnp.allclose(mbf.astype(jnp.float32), ref_mean, atol=5e-2, rtol=5e-2)

    print("KERNEL_OK")
</pallas_src>

<mosaic_0001>
module attributes {stable_mosaic.version = 11 : i64} {
  func.func @_fcgp_kernel(%arg0: i32, %arg1: memref<8x256xf32, #tpu.memory_space<vmem>>, %arg2: memref<256x512xbf16, #tpu.memory_space<vmem>>, %arg3: memref<1x512xf32, #tpu.memory_space<vmem>>, %arg4: memref<512x512xbf16, #tpu.memory_space<vmem>>, %arg5: memref<1x512xf32, #tpu.memory_space<vmem>>, %arg6: memref<512x128xbf16, #tpu.memory_space<vmem>>, %arg7: memref<1x128xf32, #tpu.memory_space<vmem>>, %arg8: memref<1x128xf32, #tpu.memory_space<vmem>>, %arg9: memref<1x128xf32, #tpu.memory_space<vmem>>, %arg10: memref<8x128xf32, #tpu.memory_space<vmem>>) attributes {dimension_semantics = [#tpu.dimension_semantics<parallel>], iteration_bounds = array<i64: 1>, scalar_prefetch = 0 : i64, scratch_operands = 0 : i64, tpu.core_type = #tpu.core_type<tc>, window_params = [{transform_indices = @transform_0, window_bounds = array<i64: 8, 256>}, {pipeline_mode = #tpu.pipeline_mode<synchronous>, transform_indices = @transform_1, window_bounds = array<i64: 256, 512>}, {pipeline_mode = #tpu.pipeline_mode<synchronous>, transform_indices = @transform_2, window_bounds = array<i64: 1, 512>}, {pipeline_mode = #tpu.pipeline_mode<synchronous>, transform_indices = @transform_3, window_bounds = array<i64: 512, 512>}, {pipeline_mode = #tpu.pipeline_mode<synchronous>, transform_indices = @transform_4, window_bounds = array<i64: 1, 512>}, {pipeline_mode = #tpu.pipeline_mode<synchronous>, transform_indices = @transform_5, window_bounds = array<i64: 512, 128>}, {pipeline_mode = #tpu.pipeline_mode<synchronous>, transform_indices = @transform_6, window_bounds = array<i64: 1, 128>}, {pipeline_mode = #tpu.pipeline_mode<synchronous>, transform_indices = @transform_7, window_bounds = array<i64: 1, 128>}, {pipeline_mode = #tpu.pipeline_mode<synchronous>, transform_indices = @transform_8, window_bounds = array<i64: 1, 128>}, {transform_indices = @transform_9, window_bounds = array<i64: 8, 128>}]} {
    %c0 = arith.constant 0 : index
    %c0_0 = arith.constant 0 : index
    %0 = vector.load %arg1[%c0, %c0_0] : memref<8x256xf32, #tpu.memory_space<vmem>>, vector<8x256xf32>
    %1 = arith.truncf %0 : vector<8x256xf32> to vector<8x256xbf16>
    %c0_1 = arith.constant 0 : index
    %c0_2 = arith.constant 0 : index
    %2 = vector.load %arg2[%c0_1, %c0_2] : memref<256x512xbf16, #tpu.memory_space<vmem>>, vector<256x512xbf16>
    %cst = arith.constant dense<0.000000e+00> : vector<8x512xf32>
    %3 = tpu.matmul %1, %2, %cst {dimension_numbers = #tpu.dot_dimension_numbers<[1], [0], [0], [1], [0, 0, 1, 1], [], []>} : vector<8x256xbf16>, vector<256x512xbf16>, vector<8x512xf32> -> vector<8x512xf32>
    %c0_3 = arith.constant 0 : index
    %c0_4 = arith.constant 0 : index
    %4 = vector.load %arg3[%c0_3, %c0_4] : memref<1x512xf32, #tpu.memory_space<vmem>>, vector<1x512xf32>
    %5 = vector.broadcast %4 : vector<1x512xf32> to vector<8x512xf32>
    %6 = arith.addf %3, %5 : vector<8x512xf32>
    %cst_5 = arith.constant 0.000000e+00 : f32
    %7 = vector.broadcast %cst_5 : f32 to vector<8x512xf32>
    %8 = arith.maximumf %6, %7 : vector<8x512xf32>
    %9 = arith.truncf %8 : vector<8x512xf32> to vector<8x512xbf16>
    %c0_6 = arith.constant 0 : index
    %c0_7 = arith.constant 0 : index
    %10 = vector.load %arg4[%c0_6, %c0_7] : memref<512x512xbf16, #tpu.memory_space<vmem>>, vector<512x512xbf16>
    %cst_8 = arith.constant dense<0.000000e+00> : vector<8x512xf32>
    %11 = tpu.matmul %9, %10, %cst_8 {dimension_numbers = #tpu.dot_dimension_numbers<[1], [0], [0], [1], [0, 0, 1, 1], [], []>} : vector<8x512xbf16>, vector<512x512xbf16>, vector<8x512xf32> -> vector<8x512xf32>
    %c0_9 = arith.constant 0 : index
    %c0_10 = arith.constant 0 : index
    %12 = vector.load %arg5[%c0_9, %c0_10] : memref<1x512xf32, #tpu.memory_space<vmem>>, vector<1x512xf32>
    %13 = vector.broadcast %12 : vector<1x512xf32> to vector<8x512xf32>
    %14 = arith.addf %11, %13 : vector<8x512xf32>
    %cst_11 = arith.constant 0.000000e+00 : f32
    %15 = vector.broadcast %cst_11 : f32 to vector<8x512xf32>
    %16 = arith.maximumf %14, %15 : vector<8x512xf32>
    %17 = arith.truncf %16 : vector<8x512xf32> to vector<8x512xbf16>
    %c0_12 = arith.constant 0 : index
    %c0_13 = arith.constant 0 : index
    %18 = vector.load %arg6[%c0_12, %c0_13] : memref<512x128xbf16, #tpu.memory_space<vmem>>, vector<512x128xbf16>
    %cst_14 = arith.constant dense<0.000000e+00> : vector<8x128xf32>
    %19 = tpu.matmul %17, %18, %cst_14 {dimension_numbers = #tpu.dot_dimension_numbers<[1], [0], [0], [1], [0, 0, 1, 1], [], []>} : vector<8x512xbf16>, vector<512x128xbf16>, vector<8x128xf32> -> vector<8x128xf32>
    %c0_15 = arith.constant 0 : index
    %c0_16 = arith.constant 0 : index
    %20 = vector.load %arg7[%c0_15, %c0_16] : memref<1x128xf32, #tpu.memory_space<vmem>>, vector<1x128xf32>
    %21 = vector.broadcast %20 : vector<1x128xf32> to vector<8x128xf32>
    %22 = arith.addf %19, %21 : vector<8x128xf32>
    %c0_17 = arith.constant 0 : index
    %c0_18 = arith.constant 0 : index
    %23 = vector.load %arg8[%c0_17, %c0_18] : memref<1x128xf32, #tpu.memory_space<vmem>>, vector<1x128xf32>
    %c0_19 = arith.constant 0 : index
    %c0_20 = arith.constant 0 : index
    %24 = vector.load %arg9[%c0_19, %c0_20] : memref<1x128xf32, #tpu.memory_space<vmem>>, vector<1x128xf32>
    %25 = vector.broadcast %23 : vector<1x128xf32> to vector<8x128xf32>
    %26 = arith.maximumf %25, %22 : vector<8x128xf32>
    %27 = vector.broadcast %24 : vector<1x128xf32> to vector<8x128xf32>
    %28 = arith.minimumf %27, %26 : vector<8x128xf32>
    %c0_21 = arith.constant 0 : index
    %c0_22 = arith.constant 0 : index
    %29 = vector.load %arg10[%c0_21, %c0_22] : memref<8x128xf32, #tpu.memory_space<vmem>>, vector<8x128xf32>
    tpu.vector_store %arg10[%c0_21, %c0_22], %28 {strides = array<i32>} : memref<8x128xf32, #tpu.memory_space<vmem>>, vector<8x128xf32>,
    return
  }
  func.func @transform_0(%arg0: i32) -> (i32, i32) {
    %c0_i32 = arith.constant 0 : i32
    %c0_i32_0 = arith.constant 0 : i32
    return %arg0, %c0_i32 : i32, i32
  }
  func.func @transform_1(%arg0: i32) -> (i32, i32) {
    %c0_i32 = arith.constant 0 : i32
    %c0_i32_0 = arith.constant 0 : i32
    %c0_i32_1 = arith.constant 0 : i32
    return %c0_i32, %c0_i32_0 : i32, i32
  }
  func.func @transform_2(%arg0: i32) -> (i32, i32) {
    %c0_i32 = arith.constant 0 : i32
    %c0_i32_0 = arith.constant 0 : i32
    %c0_i32_1 = arith.constant 0 : i32
    return %c0_i32, %c0_i32_0 : i32, i32
  }
  func.func @transform_3(%arg0: i32) -> (i32, i32) {
    %c0_i32 = arith.constant 0 : i32
    %c0_i32_0 = arith.constant 0 : i32
    %c0_i32_1 = arith.constant 0 : i32
    return %c0_i32, %c0_i32_0 : i32, i32
  }
  func.func @transform_4(%arg0: i32) -> (i32, i32) {
    %c0_i32 = arith.constant 0 : i32
    %c0_i32_0 = arith.constant 0 : i32
    %c0_i32_1 = arith.constant 0 : i32
    return %c0_i32, %c0_i32_0 : i32, i32
  }
  func.func @transform_5(%arg0: i32) -> (i32, i32) {
    %c0_i32 = arith.constant 0 : i32
    %c0_i32_0 = arith.constant 0 : i32
    %c0_i32_1 = arith.constant 0 : i32
    return %c0_i32, %c0_i32_0 : i32, i32
  }
  func.func @transform_6(%arg0: i32) -> (i32, i32) {
    %c0_i32 = arith.constant 0 : i32
    %c0_i32_0 = arith.constant 0 : i32
    %c0_i32_1 = arith.constant 0 : i32
    return %c0_i32, %c0_i32_0 : i32, i32
  }
  func.func @transform_7(%arg0: i32) -> (i32, i32) {
    %c0_i32 = arith.constant 0 : i32
    %c0_i32_0 = arith.constant 0 : i32
    %c0_i32_1 = arith.constant 0 : i32
    return %c0_i32, %c0_i32_0 : i32, i32
  }
  func.func @transform_8(%arg0: i32) -> (i32, i32) {
    %c0_i32 = arith.constant 0 : i32
    %c0_i32_0 = arith.constant 0 : i32
    %c0_i32_1 = arith.constant 0 : i32
    return %c0_i32, %c0_i32_0 : i32, i32
  }
  func.func @transform_9(%arg0: i32) -> (i32, i32) {
    %c0_i32 = arith.constant 0 : i32
    %c0_i32_0 = arith.constant 0 : i32
    return %arg0, %c0_i32 : i32, i32
  }
}

</mosaic_0001>

<llo_original>
// kernel: fcgp_forward.1
$region0: #{fcgp_forward.1}
  #allocation0 [shape = 'u32[]', space=smem, size = 0x4, offset = 0x4, fixed_abs, tag = 'smem constant byte address 0x4 - core index']
  #allocation1 [shape = 'u32[72,128]{1,0:T(1,128)}', space=vmem, size = 0x9000, scoped, tag = 'internal scratch']
  %s0 = inlined_call_operand.vmem [shape: f32[8,256], index: 0, kind: input, shape index: {}]
  %s1 = inlined_call_operand.hbm [shape: bf16[256,512], index: 1, kind: input, shape index: {}]
  %s2 = inlined_call_operand.vmem [shape: f32[1,512], index: 2, kind: input, shape index: {}]
  %s3 = inlined_call_operand.hbm [shape: bf16[512,512], index: 3, kind: input, shape index: {}]
  %s4 = inlined_call_operand.vmem [shape: f32[1,512], index: 4, kind: input, shape index: {}]
  %s5 = inlined_call_operand.vmem [shape: bf16[512,128], index: 5, kind: input, shape index: {}]
  %s6 = inlined_call_operand.vmem [shape: f32[1,128], index: 6, kind: input, shape index: {}]
  %s7 = inlined_call_operand.vmem [shape: f32[1,128], index: 7, kind: input, shape index: {}]
  %s8 = inlined_call_operand.vmem [shape: f32[1,128], index: 8, kind: input, shape index: {}]
  %s9 = inlined_call_operand.vmem [shape: f32[8,128], index: 9, kind: output, shape index: {}]
  %s10 = sld [smem:[#allocation0]]
  $region54: #{fcgp_forward.1} parent=0
    _
  %s12 = ssub.s32 1, %s10
  %s13 = scalar_select 0, %s12, %s10
  $region1: #{fcgp_forward.1} parent=0
    #allocation2 [shape = 'u8[262144]{0}', space=vmem, size = 0x40000, scoped, tag = 'input window, operand 1, single buffered']
    #allocation3 [shape = 's32[1]{0}', space=sflag, size = 0x4, scoped, tag = 'scoped memory for fcgp_forward.1']
    #allocation4 [shape = 'u8[524288]{0}', space=vmem, size = 0x80000, scoped, tag = 'input window, operand 3, single buffered']
    #allocation5 [shape = 's32[1]{0}', space=sflag, size = 0x4, scoped, tag = 'scoped memory for fcgp_forward.1']
    %14 = vsyncpa [#allocation3], 0
    %15 = vsyncpa [#allocation5], 0
    // Predicated region
    $region2: #{fcgp_forward.1} parent=1 // pred_check
      _
    $region3: #{fcgp_forward.1} parent=1 // pred_check_branch
      %17 = sbr.rel (0) target = $region5
    $region4: #{fcgp_forward.1} parent=1 // pred_region
      _
    $region5: #{fcgp_forward.1} parent=1 // pred_fallthru
      _
    // Predicated region
    $region6: #{fcgp_forward.1} parent=1 // pred_check
      _
    $region7: #{fcgp_forward.1} parent=1 // pred_check_branch
      %19 = sbr.rel (0) target = $region9
    $region8: #{fcgp_forward.1} parent=1 // pred_region
      %21 = vsyncadd [#allocation3], 0
      %s22 = sshll.u32 %s1, 4
      %s23 = int_to_ptr.hbm [resolvable:$true] %s22
      %s24 = sshll.u32 [#allocation2], 4
      %s25 = int_to_ptr.vmem [resolvable:$true] %s24
      %30 = dma.hbm_to_vmem [thread:$0]  %s23, 8192, %s25, [#allocation3], 256, 256, 16
    $region9: #{fcgp_forward.1} parent=1 // pred_fallthru
      _
    // Predicated region
    $region10: #{fcgp_forward.1} parent=1 // pred_check
      _
    $region11: #{fcgp_forward.1} parent=1 // pred_check_branch
      %32 = sbr.rel (0) target = $region13
    $region12: #{fcgp_forward.1} parent=1 // pred_region
      _
    $region13: #{fcgp_forward.1} parent=1 // pred_fallthru
      _
    // Predicated region
    $region14: #{fcgp_forward.1} parent=1 // pred_check
      _
    $region15: #{fcgp_forward.1} parent=1 // pred_check_branch
      %34 = sbr.rel (0) target = $region17
    $region16: #{fcgp_forward.1} parent=1 // pred_region
      %36 = vsyncadd [#allocation5], 0
      %s37 = sshll.u32 %s3, 4
      %s38 = int_to_ptr.hbm [resolvable:$true] %s37
      %s39 = sshll.u32 [#allocation4], 4
      %s40 = int_to_ptr.vmem [resolvable:$true] %s39
      %45 = dma.hbm_to_vmem [thread:$0]  %s38, 16384, %s40, [#allocation5], 256, 256, 16
    $region17: #{fcgp_forward.1} parent=1 // pred_fallthru
      _
    // Predicated region
    $region18: #{fcgp_forward.1} parent=1 // pred_check
      _
    $region19: #{fcgp_forward.1} parent=1 // pred_check_branch
      %47 = sbr.rel (0) target = $region21
    $region20: #{fcgp_forward.1} parent=1 // pred_region
      _
    $region21: #{fcgp_forward.1} parent=1 // pred_fallthru
      _
    // Predicated region
    $region22: #{fcgp_forward.1} parent=1 // pred_check
      _
    $region23: #{fcgp_forward.1} parent=1 // pred_check_branch
      %49 = sbr.rel (0) target = $region25
    $region24: #{fcgp_forward.1} parent=1 // pred_region
      _
    $region25: #{fcgp_forward.1} parent=1 // pred_fallthru
      _
    // Predicated region
    $region26: #{fcgp_forward.1} parent=1 // pred_check
      _
    $region27: #{fcgp_forward.1} parent=1 // pred_check_branch
      %51 = sbr.rel (0) target = $region29
    $region28: #{fcgp_forward.1} parent=1 // pred_region
      _
    $region29: #{fcgp_forward.1} parent=1 // pred_fallthru
      _
    // Predicated region
    $region30: #{fcgp_forward.1} parent=1 // pred_check
      _
    $region31: #{fcgp_forward.1} parent=1 // pred_check_branch
      %53 = sbr.rel (0) target = $region33
    $region32: #{fcgp_forward.1} parent=1 // pred_region
      _
    $region33: #{fcgp_forward.1} parent=1 // pred_fallthru
      _
    // Predicated region
    $region34: #{fcgp_forward.1} parent=1 // pred_check
      _
    $region35: #{fcgp_forward.1} parent=1 // pred_check_branch
      %55 = sbr.rel (0) target = $region37
    $region36: #{fcgp_forward.1} parent=1 // pred_region
      _
    $region37: #{fcgp_forward.1} parent=1 // pred_fallthru
      _
    // Predicated region
    $region38: #{fcgp_forward.1} parent=1 // pred_check
      _
    $region39: #{fcgp_forward.1} parent=1 // pred_check_branch
      %57 = sbr.rel (0) target = $region41
    $region40: #{fcgp_forward.1} parent=1 // pred_region
      %59 = dma.done [#allocation3], 8192
    $region41: #{fcgp_forward.1} parent=1 // pred_fallthru
      _
    // Predicated region
    $region42: #{fcgp_forward.1} parent=1 // pred_check
      _
    $region43: #{fcgp_forward.1} parent=1 // pred_check_branch
      %61 = sbr.rel (0) target = $region45
    $region44: #{fcgp_forward.1} parent=1 // pred_region
      %63 = dma.done [#allocation5], 16384
    $region45: #{fcgp_forward.1} parent=1 // pred_fallthru
      _
    %v64 = vld [vmem:[%s0] sm:$0xff]
    %v65 = vld [vmem:[%s0 + $0x8] sm:$0xff]
    %v66 = vpack.c.bf16 %v64, %v64
    %v67 = vpack.c.bf16 %v65, %v65
    %v68 = vld [vmem:[#allocation2] sm:$0xff]
    %v69 = vld [vmem:[#allocation2 + $0x8] sm:$0xff]
    %v70 = vld [vmem:[#allocation2 + $0x10] sm:$0xff]
    %v71 = vld [vmem:[#allocation2 + $0x18] sm:$0xff]
    %v72 = vld [vmem:[#allocation2 + $0x20] sm:$0xff]
    %v73 = vld [vmem:[#allocation2 + $0x28] sm:$0xff]
    %v74 = vld [vmem:[#allocation2 + $0x30] sm:$0xff]
    %v75 = vld [vmem:[#allocation2 + $0x38] sm:$0xff]
    %v76 = vld [vmem:[#allocation2 + $0x40] sm:$0xff]
    %v77 = vld [vmem:[#allocation2 + $0x48] sm:$0xff]
    %v78 = vld [vmem:[#allocation2 + $0x50] sm:$0xff]
    %v79 = vld [vmem:[#allocation2 + $0x58] sm:$0xff]
    %v80 = vld [vmem:[#allocation2 + $0x60] sm:$0xff]
    %v81 = vld [vmem:[#allocation2 + $0x68] sm:$0xff]
    %v82 = vld [vmem:[#allocation2 + $0x70] sm:$0xff]
    %v83 = vld [vmem:[#allocation2 + $0x78] sm:$0xff]
    %v84 = vld [vmem:[#allocation2 + $0x80] sm:$0xff]
    %v85 = vld [vmem:[#allocation2 + $0x88] sm:$0xff]
    %v86 = vld [vmem:[#allocation2 + $0x90] sm:$0xff]
    %v87 = vld [vmem:[#allocation2 + $0x98] sm:$0xff]
    %v88 = vld [vmem:[#allocation2 + $0xa0] sm:$0xff]
    %v89 = vld [vmem:[#allocation2 + $0xa8] sm:$0xff]
    %v90 = vld [vmem:[#allocation2 + $0xb0] sm:$0xff]
    %v91 = vld [vmem:[#allocation2 + $0xb8] sm:$0xff]
    %v92 = vld [vmem:[#allocation2 + $0xc0] sm:$0xff]
    %v93 = vld [vmem:[#allocation2 + $0xc8] sm:$0xff]
    %v94 = vld [vmem:[#allocation2 + $0xd0] sm:$0xff]
    %v95 = vld [vmem:[#allocation2 + $0xd8] sm:$0xff]
    %v96 = vld [vmem:[#allocation2 + $0xe0] sm:$0xff]
    %v97 = vld [vmem:[#allocation2 + $0xe8] sm:$0xff]
    %v98 = vld [vmem:[#allocation2 + $0xf0] sm:$0xff]
    %v99 = vld [vmem:[#allocation2 + $0xf8] sm:$0xff]
    %v100 = vld [vmem:[#allocation2 + $0x100] sm:$0xff]
    %v101 = vld [vmem:[#allocation2 + $0x108] sm:$0xff]
    %v102 = vld [vmem:[#allocation2 + $0x110] sm:$0xff]
    %v103 = vld [vmem:[#allocation2 + $0x118] sm:$0xff]
    %v104 = vld [vmem:[#allocation2 + $0x120] sm:$0xff]
    %v105 = vld [vmem:[#allocation2 + $0x128] sm:$0xff]
    %v106 = vld [vmem:[#allocation2 + $0x130] sm:$0xff]
    %v107 = vld [vmem:[#allocation2 + $0x138] sm:$0xff]
    %v108 = vld [vmem:[#allocation2 + $0x140] sm:$0xff]
    %v109 = vld [vmem:[#allocation2 + $0x148] sm:$0xff]
    %v110 = vld [vmem:[#allocation2 + $0x150] sm:$0xff]
    %v111 = vld [vmem:[#allocation2 + $0x158] sm:$0xff]
    %v112 = vld [vmem:[#allocation2 + $0x160] sm:$0xff]
    %v113 = vld [vmem:[#allocation2 + $0x168] sm:$0xff]
    %v114 = vld [vmem:[#allocation2 + $0x170] sm:$0xff]
    %v115 = vld [vmem:[#allocation2 + $0x178] sm:$0xff]
    %v116 = vld [vmem:[#allocation2 + $0x180] sm:$0xff]
    %v117 = vld [vmem:[#allocation2 + $0x188] sm:$0xff]
    %v118 = vld [vmem:[#allocation2 + $0x190] sm:$0xff]
    %v119 = vld [vmem:[#allocation2 + $0x198] sm:$0xff]
    %v120 = vld [vmem:[#allocation2 + $0x1a0] sm:$0xff]
    %v121 = vld [vmem:[#allocation2 + $0x1a8] sm:$0xff]
    %v122 = vld [vmem:[#allocation2 + $0x1b0] sm:$0xff]
    %v123 = vld [vmem:[#allocation2 + $0x1b8] sm:$0xff]
    %v124 = vld [vmem:[#allocation2 + $0x1c0] sm:$0xff]
    %v125 = vld [vmem:[#allocation2 + $0x1c8] sm:$0xff]
    %v126 = vld [vmem:[#allocation2 + $0x1d0] sm:$0xff]
    %v127 = vld [vmem:[#allocation2 + $0x1d8] sm:$0xff]
    %v128 = vld [vmem:[#allocation2 + $0x1e0] sm:$0xff]
    %v129 = vld [vmem:[#allocation2 + $0x1e8] sm:$0xff]
    %v130 = vld [vmem:[#allocation2 + $0x1f0] sm:$0xff]
    %v131 = vld [vmem:[#allocation2 + $0x1f8] sm:$0xff]
    %v132 = vld [vmem:[%s2] sm:$0xf]
    %v134 = vperm.slane %v132, 0
    %v135 = vperm.slane %v132, 1
    %v136 = vperm.slane %v132, 2
    %v137 = vperm.slane %v132, 3
    %v206 = vunpack.c.l.b16 %v68
    %v207 = vunpack.c.h.b16 %v68
    %v208 = vunpack.c.l.b16 %v69
    %v209 = vunpack.c.h.b16 %v69
    %v210 = vunpack.c.l.b16 %v70
    %v211 = vunpack.c.h.b16 %v70
    %v212 = vunpack.c.l.b16 %v71
    %v213 = vunpack.c.h.b16 %v71
    %v214 = vunpack.c.l.b16 %v72
    %v215 = vunpack.c.h.b16 %v72
    %v216 = vunpack.c.l.b16 %v73
    %v217 = vunpack.c.h.b16 %v73
    %v218 = vunpack.c.l.b16 %v74
    %v219 = vunpack.c.h.b16 %v74
    %v220 = vunpack.c.l.b16 %v75
    %v221 = vunpack.c.h.b16 %v75
    %v222 = vunpack.c.l.b16 %v76
    %v223 = vunpack.c.h.b16 %v76
    %v224 = vunpack.c.l.b16 %v77
    %v225 = vunpack.c.h.b16 %v77
    %v226 = vunpack.c.l.b16 %v78
    %v227 = vunpack.c.h.b16 %v78
    %v228 = vunpack.c.l.b16 %v79
    %v229 = vunpack.c.h.b16 %v79
    %v230 = vunpack.c.l.b16 %v80
    %v231 = vunpack.c.h.b16 %v80
    %v232 = vunpack.c.l.b16 %v81
    %v233 = vunpack.c.h.b16 %v81
    %v234 = vunpack.c.l.b16 %v82
    %v235 = vunpack.c.h.b16 %v82
    %v236 = vunpack.c.l.b16 %v83
    %v237 = vunpack.c.h.b16 %v83
    %v238 = vunpack.c.l.b16 %v84
    %v239 = vunpack.c.h.b16 %v84
    %v240 = vunpack.c.l.b16 %v85
    %v241 = vunpack.c.h.b16 %v85
    %v242 = vunpack.c.l.b16 %v86
    %v243 = vunpack.c.h.b16 %v86
    %v244 = vunpack.c.l.b16 %v87
    %v245 = vunpack.c.h.b16 %v87
    %v246 = vunpack.c.l.b16 %v88
    %v247 = vunpack.c.h.b16 %v88
    %v248 = vunpack.c.l.b16 %v89
    %v249 = vunpack.c.h.b16 %v89
    %v250 = vunpack.c.l.b16 %v90
    %v251 = vunpack.c.h.b16 %v90
    %v252 = vunpack.c.l.b16 %v91
    %v253 = vunpack.c.h.b16 %v91
    %v254 = vunpack.c.l.b16 %v92
    %v255 = vunpack.c.h.b16 %v92
    %v256 = vunpack.c.l.b16 %v93
    %v257 = vunpack.c.h.b16 %v93
    %v258 = vunpack.c.l.b16 %v94
    %v259 = vunpack.c.h.b16 %v94
    %v260 = vunpack.c.l.b16 %v95
    %v261 = vunpack.c.h.b16 %v95
    %v262 = vunpack.c.l.b16 %v96
    %v263 = vunpack.c.h.b16 %v96
    %v264 = vunpack.c.l.b16 %v97
    %v265 = vunpack.c.h.b16 %v97
    %v266 = vunpack.c.l.b16 %v98
    %v267 = vunpack.c.h.b16 %v98
    %v268 = vunpack.c.l.b16 %v99
    %v269 = vunpack.c.h.b16 %v99
    %v270 = vunpack.c.l.b16 %v100
    %v271 = vunpack.c.h.b16 %v100
    %v272 = vunpack.c.l.b16 %v101
    %v273 = vunpack.c.h.b16 %v101
    %v274 = vunpack.c.l.b16 %v102
    %v275 = vunpack.c.h.b16 %v102
    %v276 = vunpack.c.l.b16 %v103
    %v277 = vunpack.c.h.b16 %v103
    %v278 = vunpack.c.l.b16 %v104
    %v279 = vunpack.c.h.b16 %v104
    %v280 = vunpack.c.l.b16 %v105
    %v281 = vunpack.c.h.b16 %v105
    %v282 = vunpack.c.l.b16 %v106
    %v283 = vunpack.c.h.b16 %v106
    %v284 = vunpack.c.l.b16 %v107
    %v285 = vunpack.c.h.b16 %v107
    %v286 = vunpack.c.l.b16 %v108
    %v287 = vunpack.c.h.b16 %v108
    %v288 = vunpack.c.l.b16 %v109
    %v289 = vunpack.c.h.b16 %v109
    %v290 = vunpack.c.l.b16 %v110
    %v291 = vunpack.c.h.b16 %v110
    %v292 = vunpack.c.l.b16 %v111
    %v293 = vunpack.c.h.b16 %v111
    %v294 = vunpack.c.l.b16 %v112
    %v295 = vunpack.c.h.b16 %v112
    %v296 = vunpack.c.l.b16 %v113
    %v297 = vunpack.c.h.b16 %v113
    %v298 = vunpack.c.l.b16 %v114
    %v299 = vunpack.c.h.b16 %v114
    %v300 = vunpack.c.l.b16 %v115
    %v301 = vunpack.c.h.b16 %v115
    %v302 = vunpack.c.l.b16 %v116
    %v303 = vunpack.c.h.b16 %v116
    %v304 = vunpack.c.l.b16 %v117
    %v305 = vunpack.c.h.b16 %v117
    %v306 = vunpack.c.l.b16 %v118
    %v307 = vunpack.c.h.b16 %v118
    %v308 = vunpack.c.l.b16 %v119
    %v309 = vunpack.c.h.b16 %v119
    %v310 = vunpack.c.l.b16 %v120
    %v311 = vunpack.c.h.b16 %v120
    %v312 = vunpack.c.l.b16 %v121
    %v313 = vunpack.c.h.b16 %v121
    %v314 = vunpack.c.l.b16 %v122
    %v315 = vunpack.c.h.b16 %v122
    %v316 = vunpack.c.l.b16 %v123
    %v317 = vunpack.c.h.b16 %v123
    %v318 = vunpack.c.l.b16 %v124
    %v319 = vunpack.c.h.b16 %v124
    %v320 = vunpack.c.l.b16 %v125
    %v321 = vunpack.c.h.b16 %v125
    %v322 = vunpack.c.l.b16 %v126
    %v323 = vunpack.c.h.b16 %v126
    %v324 = vunpack.c.l.b16 %v127
    %v325 = vunpack.c.h.b16 %v127
    %v326 = vunpack.c.l.b16 %v128
    %v327 = vunpack.c.h.b16 %v128
    %v328 = vunpack.c.l.b16 %v129
    %v329 = vunpack.c.h.b16 %v129
    %v330 = vunpack.c.l.b16 %v130
    %v331 = vunpack.c.h.b16 %v130
    %v332 = vunpack.c.l.b16 %v131
    %v333 = vunpack.c.h.b16 %v131
    %v334 = vpack.c.b16 %v210, %v206
    %v335 = vpack.c.b16 %v211, %v207
    %v336 = vpack.c.b16 %v212, %v208
    %v337 = vpack.c.b16 %v213, %v209
    %v338 = vpack.c.b16 %v218, %v214
    %v339 = vpack.c.b16 %v219, %v215
    %v340 = vpack.c.b16 %v220, %v216
    %v341 = vpack.c.b16 %v221, %v217
    %v342 = vpack.c.b16 %v226, %v222
    %v343 = vpack.c.b16 %v227, %v223
    %v344 = vpack.c.b16 %v228, %v224
    %v345 = vpack.c.b16 %v229, %v225
    %v346 = vpack.c.b16 %v234, %v230
    %v347 = vpack.c.b16 %v235, %v231
    %v348 = vpack.c.b16 %v236, %v232
    %v349 = vpack.c.b16 %v237, %v233
    %v350 = vpack.c.b16 %v242, %v238
    %v351 = vpack.c.b16 %v243, %v239
    %v352 = vpack.c.b16 %v244, %v240
    %v353 = vpack.c.b16 %v245, %v241
    %v354 = vpack.c.b16 %v250, %v246
    %v355 = vpack.c.b16 %v251, %v247
    %v356 = vpack.c.b16 %v252, %v248
    %v357 = vpack.c.b16 %v253, %v249
    %v358 = vpack.c.b16 %v258, %v254
    %v359 = vpack.c.b16 %v259, %v255
    %v360 = vpack.c.b16 %v260, %v256
    %v361 = vpack.c.b16 %v261, %v257
    %v362 = vpack.c.b16 %v266, %v262
    %v363 = vpack.c.b16 %v267, %v263
    %v364 = vpack.c.b16 %v268, %v264
    %v365 = vpack.c.b16 %v269, %v265
    %v366 = vpack.c.b16 %v274, %v270
    %v367 = vpack.c.b16 %v275, %v271
    %v368 = vpack.c.b16 %v276, %v272
    %v369 = vpack.c.b16 %v277, %v273
    %v370 = vpack.c.b16 %v282, %v278
    %v371 = vpack.c.b16 %v283, %v279
    %v372 = vpack.c.b16 %v284, %v280
    %v373 = vpack.c.b16 %v285, %v281
    %v374 = vpack.c.b16 %v290, %v286
    %v375 = vpack.c.b16 %v291, %v287
    %v376 = vpack.c.b16 %v292, %v288
    %v377 = vpack.c.b16 %v293, %v289
    %v378 = vpack.c.b16 %v298, %v294
    %v379 = vpack.c.b16 %v299, %v295
    %v380 = vpack.c.b16 %v300, %v296
    %v381 = vpack.c.b16 %v301, %v297
    %v382 = vpack.c.b16 %v306, %v302
    %v383 = vpack.c.b16 %v307, %v303
    %v384 = vpack.c.b16 %v308, %v304
    %v385 = vpack.c.b16 %v309, %v305
    %v386 = vpack.c.b16 %v314, %v310
    %v387 = vpack.c.b16 %v315, %v311
    %v388 = vpack.c.b16 %v316, %v312
    %v389 = vpack.c.b16 %v317, %v313
    %v390 = vpack.c.b16 %v322, %v318
    %v391 = vpack.c.b16 %v323, %v319
    %v392 = vpack.c.b16 %v324, %v320
    %v393 = vpack.c.b16 %v325, %v321
    %v394 = vpack.c.b16 %v330, %v326
    %v395 = vpack.c.b16 %v331, %v327
    %v396 = vpack.c.b16 %v332, %v328
    %v397 = vpack.c.b16 %v333, %v329
    %462 = vmatpush.bf16.msra.mxu0 %v362
    %463 = vmatpush.bf16.msra.mxu0 %v358
    %464 = vmatpush.bf16.msra.mxu0 %v354
    %465 = vmatpush.bf16.msra.mxu0 %v350
    %466 = vmatpush.bf16.msra.mxu0 %v346
    %467 = vmatpush.bf16.msra.mxu0 %v342
    %468 = vmatpush.bf16.msra.mxu0 %v338
    %469 = vmatpush.bf16.msra.mxu0 %v334
    %470 = vmatmul.bf16.gmra.mxu0 %v66
    %v471 = vpop.f32.mrf.mxu0
    %v472 = vadd.f32 %v134, %v471
    %v473 = vpop.f32.mrf.mxu0
    %474 = vdwg.mxu0
    %475 = vmatpush.bf16.msra.mxu0 %v394
    %476 = vmatpush.bf16.msra.mxu0 %v390
    %477 = vmatpush.bf16.msra.mxu0 %v386
    %478 = vmatpush.bf16.msra.mxu0 %v382
    %479 = vmatpush.bf16.msra.mxu0 %v378
    %480 = vmatpush.bf16.msra.mxu0 %v374
    %481 = vmatpush.bf16.msra.mxu0 %v370
    %482 = vmatpush.bf16.msra.mxu0 %v366
    %483 = vmatmul.bf16.gmra.mxu0 %v67
    %v484 = vpop.f32.mrf.mxu0
    %v485 = vadd.f32 %v472, %v484
    %v486 = vpop.f32.mrf.mxu0
    %487 = vdwg.mxu0
    %488 = vmatpush.bf16.msra.mxu0 %v363
    %489 = vmatpush.bf16.msra.mxu0 %v359
    %490 = vmatpush.bf16.msra.mxu0 %v355
    %491 = vmatpush.bf16.msra.mxu0 %v351
    %492 = vmatpush.bf16.msra.mxu0 %v347
    %493 = vmatpush.bf16.msra.mxu0 %v343
    %494 = vmatpush.bf16.msra.mxu0 %v339
    %495 = vmatpush.bf16.msra.mxu0 %v335
    %496 = vmatmul.bf16.gmra.mxu0 %v66
    %v497 = vpop.f32.mrf.mxu0
    %v498 = vadd.f32 %v135, %v497
    %v499 = vpop.f32.mrf.mxu0
    %500 = vdwg.mxu0
    %501 = vmatpush.bf16.msra.mxu0 %v395
    %502 = vmatpush.bf16.msra.mxu0 %v391
    %503 = vmatpush.bf16.msra.mxu0 %v387
    %504 = vmatpush.bf16.msra.mxu0 %v383
    %505 = vmatpush.bf16.msra.mxu0 %v379
    %506 = vmatpush.bf16.msra.mxu0 %v375
    %507 = vmatpush.bf16.msra.mxu0 %v371
    %508 = vmatpush.bf16.msra.mxu0 %v367
    %509 = vmatmul.bf16.gmra.mxu0 %v67
    %v510 = vpop.f32.mrf.mxu0
    %v511 = vadd.f32 %v498, %v510
    %v512 = vpop.f32.mrf.mxu0
    %513 = vdwg.mxu0
    %514 = vmatpush.bf16.msra.mxu0 %v364
    %515 = vmatpush.bf16.msra.mxu0 %v360
    %516 = vmatpush.bf16.msra.mxu0 %v356
    %517 = vmatpush.bf16.msra.mxu0 %v352
    %518 = vmatpush.bf16.msra.mxu0 %v348
    %519 = vmatpush.bf16.msra.mxu0 %v344
    %520 = vmatpush.bf16.msra.mxu0 %v340
    %521 = vmatpush.bf16.msra.mxu0 %v336
    %522 = vmatmul.bf16.gmra.mxu0 %v66
    %v523 = vpop.f32.mrf.mxu0
    %v524 = vadd.f32 %v136, %v523
    %v525 = vpop.f32.mrf.mxu0
    %526 = vdwg.mxu0
    %527 = vmatpush.bf16.msra.mxu0 %v396
    %528 = vmatpush.bf16.msra.mxu0 %v392
    %529 = vmatpush.bf16.msra.mxu0 %v388
    %530 = vmatpush.bf16.msra.mxu0 %v384
    %531 = vmatpush.bf16.msra.mxu0 %v380
    %532 = vmatpush.bf16.msra.mxu0 %v376
    %533 = vmatpush.bf16.msra.mxu0 %v372
    %534 = vmatpush.bf16.msra.mxu0 %v368
    %535 = vmatmul.bf16.gmra.mxu0 %v67
    %v536 = vpop.f32.mrf.mxu0
    %v537 = vadd.f32 %v524, %v536
    %v538 = vpop.f32.mrf.mxu0
    %539 = vdwg.mxu0
    %540 = vmatpush.bf16.msra.mxu0 %v365
    %541 = vmatpush.bf16.msra.mxu0 %v361
    %542 = vmatpush.bf16.msra.mxu0 %v357
    %543 = vmatpush.bf16.msra.mxu0 %v353
    %544 = vmatpush.bf16.msra.mxu0 %v349
    %545 = vmatpush.bf16.msra.mxu0 %v345
    %546 = vmatpush.bf16.msra.mxu0 %v341
    %547 = vmatpush.bf16.msra.mxu0 %v337
    %548 = vmatmul.bf16.gmra.mxu0 %v66
    %v549 = vpop.f32.mrf.mxu0
    %v550 = vadd.f32 %v137, %v549
    %v551 = vpop.f32.mrf.mxu0
    %552 = vdwg.mxu0
    %553 = vmatpush.bf16.msra.mxu0 %v397
    %554 = vmatpush.bf16.msra.mxu0 %v393
    %555 = vmatpush.bf16.msra.mxu0 %v389
    %556 = vmatpush.bf16.msra.mxu0 %v385
    %557 = vmatpush.bf16.msra.mxu0 %v381
    %558 = vmatpush.bf16.msra.mxu0 %v377
    %559 = vmatpush.bf16.msra.mxu0 %v373
    %560 = vmatpush.bf16.msra.mxu0 %v369
    %561 = vmatmul.bf16.gmra.mxu0 %v67
    %v562 = vpop.f32.mrf.mxu0
    %v563 = vadd.f32 %v550, %v562
    %v564 = vpop.f32.mrf.mxu0
    %565 = vdwg.mxu0
    %v566 = vmax.f32 %v485, 0.0
    %v567 = vmax.f32 %v511, 0.0
    %v568 = vmax.f32 %v537, 0.0
    %v569 = vmax.f32 %v563, 0.0
    %v570 = vpack.c.bf16 %v566, %v566
    %v571 = vpack.c.bf16 %v567, %v567
    %v572 = vpack.c.bf16 %v568, %v568
    %v573 = vpack.c.bf16 %v569, %v569
    %v574 = vld [vmem:[#allocation4] sm:$0xff]
    %v575 = vld [vmem:[#allocation4 + $0x8] sm:$0xff]
    %v576 = vld [vmem:[#allocation4 + $0x10] sm:$0xff]
    %v577 = vld [vmem:[#allocation4 + $0x18] sm:$0xff]
    %v578 = vld [vmem:[#allocation4 + $0x20] sm:$0xff]
    %v579 = vld [vmem:[#allocation4 + $0x28] sm:$0xff]
    %v580 = vld [vmem:[#allocation4 + $0x30] sm:$0xff]
    %v581 = vld [vmem:[#allocation4 + $0x38] sm:$0xff]
    %v582 = vld [vmem:[#allocation4 + $0x40] sm:$0xff]
    %v583 = vld [vmem:[#allocation4 + $0x48] sm:$0xff]
    %v584 = vld [vmem:[#allocation4 + $0x50] sm:$0xff]
    %v585 = vld [vmem:[#allocation4 + $0x58] sm:$0xff]
    %v586 = vld [vmem:[#allocation4 + $0x60] sm:$0xff]
    %v587 = vld [vmem:[#allocation4 + $0x68] sm:$0xff]
    %v588 = vld [vmem:[#allocation4 + $0x70] sm:$0xff]
    %v589 = vld [vmem:[#allocation4 + $0x78] sm:$0xff]
    %v590 = vld [vmem:[#allocation4 + $0x80] sm:$0xff]
    %v591 = vld [vmem:[#allocation4 + $0x88] sm:$0xff]
    %v592 = vld [vmem:[#allocation4 + $0x90] sm:$0xff]
    %v593 = vld [vmem:[#allocation4 + $0x98] sm:$0xff]
    %v594 = vld [vmem:[#allocation4 + $0xa0] sm:$0xff]
    %v595 = vld [vmem:[#allocation4 + $0xa8] sm:$0xff]
    %v596 = vld [vmem:[#allocation4 + $0xb0] sm:$0xff]
    %v597 = vld [vmem:[#allocation4 + $0xb8] sm:$0xff]
    %v598 = vld [vmem:[#allocation4 + $0xc0] sm:$0xff]
    %v599 = vld [vmem:[#allocation4 + $0xc8] sm:$0xff]
    %v600 = vld [vmem:[#allocation4 + $0xd0] sm:$0xff]
    %v601 = vld [vmem:[#allocation4 + $0xd8] sm:$0xff]
    %v602 = vld [vmem:[#allocation4 + $0xe0] sm:$0xff]
    %v603 = vld [vmem:[#allocation4 + $0xe8] sm:$0xff]
    %v604 = vld [vmem:[#allocation4 + $0xf0] sm:$0xff]
    %v605 = vld [vmem:[#allocation4 + $0xf8] sm:$0xff]
    %v606 = vld [vmem:[#allocation4 + $0x100] sm:$0xff]
    %v607 = vld [vmem:[#allocation4 + $0x108] sm:$0xff]
    %v608 = vld [vmem:[#allocation4 + $0x110] sm:$0xff]
    %v609 = vld [vmem:[#allocation4 + $0x118] sm:$0xff]
    %v610 = vld [vmem:[#allocation4 + $0x120] sm:$0xff]
    %v611 = vld [vmem:[#allocation4 + $0x128] sm:$0xff]
    %v612 = vld [vmem:[#allocation4 + $0x130] sm:$0xff]
    %v613 = vld [vmem:[#allocation4 + $0x138] sm:$0xff]
    %v614 = vld [vmem:[#allocation4 + $0x140] sm:$0xff]
    %v615 = vld [vmem:[#allocation4 + $0x148] sm:$0xff]
    %v616 = vld [vmem:[#allocation4 + $0x150] sm:$0xff]
    %v617 = vld [vmem:[#allocation4 + $0x158] sm:$0xff]
    %v618 = vld [vmem:[#allocation4 + $0x160] sm:$0xff]
    %v619 = vld [vmem:[#allocation4 + $0x168] sm:$0xff]
    %v620 = vld [vmem:[#allocation4 + $0x170] sm:$0xff]
    %v621 = vld [vmem:[#allocation4 + $0x178] sm:$0xff]
    %v622 = vld [vmem:[#allocation4 + $0x180] sm:$0xff]
    %v623 = vld [vmem:[#allocation4 + $0x188] sm:$0xff]
    %v624 = vld [vmem:[#allocation4 + $0x190] sm:$0xff]
    %v625 = vld [vmem:[#allocation4 + $0x198] sm:$0xff]
    %v626 = vld [vmem:[#allocation4 + $0x1a0] sm:$0xff]
    %v627 = vld [vmem:[#allocation4 + $0x1a8] sm:$0xff]
    %v628 = vld [vmem:[#allocation4 + $0x1b0] sm:$0xff]
    %v629 = vld [vmem:[#allocation4 + $0x1b8] sm:$0xff]
    %v630 = vld [vmem:[#allocation4 + $0x1c0] sm:$0xff]
    %v631 = vld [vmem:[#allocation4 + $0x1c8] sm:$0xff]
    %v632 = vld [vmem:[#allocation4 + $0x1d0] sm:$0xff]
    %v633 = vld [vmem:[#allocation4 + $0x1d8] sm:$0xff]
    %v634 = vld [vmem:[#allocation4 + $0x1e0] sm:$0xff]
    %v635 = vld [vmem:[#allocation4 + $0x1e8] sm:$0xff]
    %v636 = vld [vmem:[#allocation4 + $0x1f0] sm:$0xff]
    %v637 = vld [vmem:[#allocation4 + $0x1f8] sm:$0xff]
    %v638 = vld [vmem:[#allocation4 + $0x200] sm:$0xff]
    %v639 = vld [vmem:[#allocation4 + $0x208] sm:$0xff]
    %v640 = vld [vmem:[#allocation4 + $0x210] sm:$0xff]
    %v641 = vld [vmem:[#allocation4 + $0x218] sm:$0xff]
    %v642 = vld [vmem:[#allocation4 + $0x220] sm:$0xff]
    %v643 = vld [vmem:[#allocation4 + $0x228] sm:$0xff]
    %v644 = vld [vmem:[#allocation4 + $0x230] sm:$0xff]
    %v645 = vld [vmem:[#allocation4 + $0x238] sm:$0xff]
    %v646 = vld [vmem:[#allocation4 + $0x240] sm:$0xff]
    %v647 = vld [vmem:[#allocation4 + $0x248] sm:$0xff]
    %v648 = vld [vmem:[#allocation4 + $0x250] sm:$0xff]
    %v649 = vld [vmem:[#allocation4 + $0x258] sm:$0xff]
    %v650 = vld [vmem:[#allocation4 + $0x260] sm:$0xff]
    %v651 = vld [vmem:[#allocation4 + $0x268] sm:$0xff]
    %v652 = vld [vmem:[#allocation4 + $0x270] sm:$0xff]
    %v653 = vld [vmem:[#allocation4 + $0x278] sm:$0xff]
    %v654 = vld [vmem:[#allocation4 + $0x280] sm:$0xff]
    %v655 = vld [vmem:[#allocation4 + $0x288] sm:$0xff]
    %v656 = vld [vmem:[#allocation4 + $0x290] sm:$0xff]
    %v657 = vld [vmem:[#allocation4 + $0x298] sm:$0xff]
    %v658 = vld [vmem:[#allocation4 + $0x2a0] sm:$0xff]
    %v659 = vld [vmem:[#allocation4 + $0x2a8] sm:$0xff]
    %v660 = vld [vmem:[#allocation4 + $0x2b0] sm:$0xff]
    %v661 = vld [vmem:[#allocation4 + $0x2b8] sm:$0xff]
    %v662 = vld [vmem:[#allocation4 + $0x2c0] sm:$0xff]
    %v663 = vld [vmem:[#allocation4 + $0x2c8] sm:$0xff]
    %v664 = vld [vmem:[#allocation4 + $0x2d0] sm:$0xff]
    %v665 = vld [vmem:[#allocation4 + $0x2d8] sm:$0xff]
    %v666 = vld [vmem:[#allocation4 + $0x2e0] sm:$0xff]
    %v667 = vld [vmem:[#allocation4 + $0x2e8] sm:$0xff]
    %v668 = vld [vmem:[#allocation4 + $0x2f0] sm:$0xff]
    %v669 = vld [vmem:[#allocation4 + $0x2f8] sm:$0xff]
    %v670 = vld [vmem:[#allocation4 + $0x300] sm:$0xff]
    %v671 = vld [vmem:[#allocation4 + $0x308] sm:$0xff]
    %v672 = vld [vmem:[#allocation4 + $0x310] sm:$0xff]
    %v673 = vld [vmem:[#allocation4 + $0x318] sm:$0xff]
    %v674 = vld [vmem:[#allocation4 + $0x320] sm:$0xff]
    %v675 = vld [vmem:[#allocation4 + $0x328] sm:$0xff]
    %v676 = vld [vmem:[#allocation4 + $0x330] sm:$0xff]
    %v677 = vld [vmem:[#allocation4 + $0x338] sm:$0xff]
    %v678 = vld [vmem:[#allocation4 + $0x340] sm:$0xff]
    %v679 = vld [vmem:[#allocation4 + $0x348] sm:$0xff]
    %v680 = vld [vmem:[#allocation4 + $0x350] sm:$0xff]
    %v681 = vld [vmem:[#allocation4 + $0x358] sm:$0xff]
    %v682 = vld [vmem:[#allocation4 + $0x360] sm:$0xff]
    %v683 = vld [vmem:[#allocation4 + $0x368] sm:$0xff]
    %v684 = vld [vmem:[#allocation4 + $0x370] sm:$0xff]
    %v685 = vld [vmem:[#allocation4 + $0x378] sm:$0xff]
    %v686 = vld [vmem:[#allocation4 + $0x380] sm:$0xff]
    %v687 = vld [vmem:[#allocation4 + $0x388] sm:$0xff]
    %v688 = vld [vmem:[#allocation4 + $0x390] sm:$0xff]
    %v689 = vld [vmem:[#allocation4 + $0x398] sm:$0xff]
    %v690 = vld [vmem:[#allocation4 + $0x3a0] sm:$0xff]
    %v691 = vld [vmem:[#allocation4 + $0x3a8] sm:$0xff]
    %v692 = vld [vmem:[#allocation4 + $0x3b0] sm:$0xff]
    %v693 = vld [vmem:[#allocation4 + $0x3b8] sm:$0xff]
    %v694 = vld [vmem:[#allocation4 + $0x3c0] sm:$0xff]
    %v695 = vld [vmem:[#allocation4 + $0x3c8] sm:$0xff]
    %v696 = vld [vmem:[#allocation4 + $0x3d0] sm:$0xff]
    %v697 = vld [vmem:[#allocation4 + $0x3d8] sm:$0xff]
    %v698 = vld [vmem:[#allocation4 + $0x3e0] sm:$0xff]
    %v699 = vld [vmem:[#allocation4 + $0x3e8] sm:$0xff]
    %v700 = vld [vmem:[#allocation4 + $0x3f0] sm:$0xff]
    %v701 = vld [vmem:[#allocation4 + $0x3f8] sm:$0xff]
    %v702 = vld [vmem:[%s4] sm:$0xf]
    %v704 = vperm.slane %v702, 0
    %v705 = vperm.slane %v702, 1
    %v706 = vperm.slane %v702, 2
    %v707 = vperm.slane %v702, 3
    %v840 = vunpack.c.l.b16 %v574
    %v841 = vunpack.c.h.b16 %v574
    %v842 = vunpack.c.l.b16 %v575
    %v843 = vunpack.c.h.b16 %v575
    %v844 = vunpack.c.l.b16 %v576
    %v845 = vunpack.c.h.b16 %v576
    %v846 = vunpack.c.l.b16 %v577
    %v847 = vunpack.c.h.b16 %v577
    %v848 = vunpack.c.l.b16 %v578
    %v849 = vunpack.c.h.b16 %v578
    %v850 = vunpack.c.l.b16 %v579
    %v851 = vunpack.c.h.b16 %v579
    %v852 = vunpack.c.l.b16 %v580
    %v853 = vunpack.c.h.b16 %v580
    %v854 = vunpack.c.l.b16 %v581
    %v855 = vunpack.c.h.b16 %v581
    %v856 = vunpack.c.l.b16 %v582
    %v857 = vunpack.c.h.b16 %v582
    %v858 = vunpack.c.l.b16 %v583
    %v859 = vunpack.c.h.b16 %v583
    %v860 = vunpack.c.l.b16 %v584
    %v861 = vunpack.c.h.b16 %v584
    %v862 = vunpack.c.l.b16 %v585
    %v863 = vunpack.c.h.b16 %v585
    %v864 = vunpack.c.l.b16 %v586
    %v865 = vunpack.c.h.b16 %v586
    %v866 = vunpack.c.l.b16 %v587
    %v867 = vunpack.c.h.b16 %v587
    %v868 = vunpack.c.l.b16 %v588
    %v869 = vunpack.c.h.b16 %v588
    %v870 = vunpack.c.l.b16 %v589
    %v871 = vunpack.c.h.b16 %v589
    %v872 = vunpack.c.l.b16 %v590
    %v873 = vunpack.c.h.b16 %v590
    %v874 = vunpack.c.l.b16 %v591
    %v875 = vunpack.c.h.b16 %v591
    %v876 = vunpack.c.l.b16 %v592
    %v877 = vunpack.c.h.b16 %v592
    %v878 = vunpack.c.l.b16 %v593
    %v879 = vunpack.c.h.b16 %v593
    %v880 = vunpack.c.l.b16 %v594
    %v881 = vunpack.c.h.b16 %v594
    %v882 = vunpack.c.l.b16 %v595
    %v883 = vunpack.c.h.b16 %v595
    %v884 = vunpack.c.l.b16 %v596
    %v885 = vunpack.c.h.b16 %v596
    %v886 = vunpack.c.l.b16 %v597
    %v887 = vunpack.c.h.b16 %v597
    %v888 = vunpack.c.l.b16 %v598
    %v889 = vunpack.c.h.b16 %v598
    %v890 = vunpack.c.l.b16 %v599
    %v891 = vunpack.c.h.b16 %v599
    %v892 = vunpack.c.l.b16 %v600
    %v893 = vunpack.c.h.b16 %v600
    %v894 = vunpack.c.l.b16 %v601
    %v895 = vunpack.c.h.b16 %v601
    %v896 = vunpack.c.l.b16 %v602
    %v897 = vunpack.c.h.b16 %v602
    %v898 = vunpack.c.l.b16 %v603
    %v899 = vunpack.c.h.b16 %v603
    %v900 = vunpack.c.l.b16 %v604
    %v901 = vunpack.c.h.b16 %v604
    %v902 = vunpack.c.l.b16 %v605
    %v903 = vunpack.c.h.b16 %v605
    %v904 = vunpack.c.l.b16 %v606
    %v905 = vunpack.c.h.b16 %v606
    %v906 = vunpack.c.l.b16 %v607
    %v907 = vunpack.c.h.b16 %v607
    %v908 = vunpack.c.l.b16 %v608
    %v909 = vunpack.c.h.b16 %v608
    %v910 = vunpack.c.l.b16 %v609
    %v911 = vunpack.c.h.b16 %v609
    %v912 = vunpack.c.l.b16 %v610
    %v913 = vunpack.c.h.b16 %v610
    %v914 = vunpack.c.l.b16 %v611
    %v915 = vunpack.c.h.b16 %v611
    %v916 = vunpack.c.l.b16 %v612
    %v917 = vunpack.c.h.b16 %v612
    %v918 = vunpack.c.l.b16 %v613
    %v919 = vunpack.c.h.b16 %v613
    %v920 = vunpack.c.l.b16 %v614
    %v921 = vunpack.c.h.b16 %v614
    %v922 = vunpack.c.l.b16 %v615
    %v923 = vunpack.c.h.b16 %v615
    %v924 = vunpack.c.l.b16 %v616
    %v925 = vunpack.c.h.b16 %v616
    %v926 = vunpack.c.l.b16 %v617
    %v927 = vunpack.c.h.b16 %v617
    %v928 = vunpack.c.l.b16 %v618
    %v929 = vunpack.c.h.b16 %v618
    %v930 = vunpack.c.l.b16 %v619
    %v931 = vunpack.c.h.b16 %v619
    %v932 = vunpack.c.l.b16 %v620
    %v933 = vunpack.c.h.b16 %v620
    %v934 = vunpack.c.l.b16 %v621
    %v935 = vunpack.c.h.b16 %v621
    %v936 = vunpack.c.l.b16 %v622
    %v937 = vunpack.c.h.b16 %v622
    %v938 = vunpack.c.l.b16 %v623
    %v939 = vunpack.c.h.b16 %v623
    %v940 = vunpack.c.l.b16 %v624
    %v941 = vunpack.c.h.b16 %v624
    %v942 = vunpack.c.l.b16 %v625
    %v943 = vunpack.c.h.b16 %v625
    %v944 = vunpack.c.l.b16 %v626
    %v945 = vunpack.c.h.b16 %v626
    %v946 = vunpack.c.l.b16 %v627
    %v947 = vunpack.c.h.b16 %v627
    %v948 = vunpack.c.l.b16 %v628
    %v949 = vunpack.c.h.b16 %v628
    %v950 = vunpack.c.l.b16 %v629
    %v951 = vunpack.c.h.b16 %v629
    %v952 = vunpack.c.l.b16 %v630
    %v953 = vunpack.c.h.b16 %v630
    %v954 = vunpack.c.l.b16 %v631
    %v955 = vunpack.c.h.b16 %v631
    %v956 = vunpack.c.l.b16 %v632
    %v957 = vunpack.c.h.b16 %v632
    %v958 = vunpack.c.l.b16 %v633
    %v959 = vunpack.c.h.b16 %v633
    %v960 = vunpack.c.l.b16 %v634
    %v961 = vunpack.c.h.b16 %v634
    %v962 = vunpack.c.l.b16 %v635
    %v963 = vunpack.c.h.b16 %v635
    %v964 = vunpack.c.l.b16 %v636
    %v965 = vunpack.c.h.b16 %v636
    %v966 = vunpack.c.l.b16 %v637
    %v967 = vunpack.c.h.b16 %v637
    %v968 = vunpack.c.l.b16 %v638
    %v969 = vunpack.c.h.b16 %v638
    %v970 = vunpack.c.l.b16 %v639
    %v971 = vunpack.c.h.b16 %v639
    %v972 = vunpack.c.l.b16 %v640
    %v973 = vunpack.c.h.b16 %v640
    %v974 = vunpack.c.l.b16 %v641
    %v975 = vunpack.c.h.b16 %v641
    %v976 = vunpack.c.l.b16 %v642
    %v977 = vunpack.c.h.b16 %v642
    %v978 = vunpack.c.l.b16 %v643
    %v979 = vunpack.c.h.b16 %v643
    %v980 = vunpack.c.l.b16 %v644
    %v981 = vunpack.c.h.b16 %v644
    %v982 = vunpack.c.l.b16 %v645
    %v983 = vunpack.c.h.b16 %v645
    %v984 = vunpack.c.l.b16 %v646
    %v985 = vunpack.c.h.b16 %v646
    %v986 = vunpack.c.l.b16 %v647
    %v987 = vunpack.c.h.b16 %v647
    %v988 = vunpack.c.l.b16 %v648
    %v989 = vunpack.c.h.b16 %v648
    %v990 = vunpack.c.l.b16 %v649
    %v991 = vunpack.c.h.b16 %v649
    %v992 = vunpack.c.l.b16 %v650
    %v993 = vunpack.c.h.b16 %v650
    %v994 = vunpack.c.l.b16 %v651
    %v995 = vunpack.c.h.b16 %v651
    %v996 = vunpack.c.l.b16 %v652
    %v997 = vunpack.c.h.b16 %v652
    %v998 = vunpack.c.l.b16 %v653
    %v999 = vunpack.c.h.b16 %v653
    %v1000 = vunpack.c.l.b16 %v654
    %v1001 = vunpack.c.h.b16 %v654
    %v1002 = vunpack.c.l.b16 %v655
    %v1003 = vunpack.c.h.b16 %v655
    %v1004 = vunpack.c.l.b16 %v656
    %v1005 = vunpack.c.h.b16 %v656
    %v1006 = vunpack.c.l.b16 %v657
    %v1007 = vunpack.c.h.b16 %v657
    %v1008 = vunpack.c.l.b16 %v658
    %v1009 = vunpack.c.h.b16 %v658
    %v1010 = vunpack.c.l.b16 %v659
    %v1011 = vunpack.c.h.b16 %v659
    %v1012 = vunpack.c.l.b16 %v660
    %v1013 = vunpack.c.h.b16 %v660
    %v1014 = vunpack.c.l.b16 %v661
    %v1015 = vunpack.c.h.b16 %v661
    %v1016 = vunpack.c.l.b16 %v662
    %v1017 = vunpack.c.h.b16 %v662
    %v1018 = vunpack.c.l.b16 %v663
    %v1019 = vunpack.c.h.b16 %v663
    %v1020 = vunpack.c.l.b16 %v664
    %v1021 = vunpack.c.h.b16 %v664
    %v1022 = vunpack.c.l.b16 %v665
    %v1023 = vunpack.c.h.b16 %v665
    %v1024 = vunpack.c.l.b16 %v666
    %v1025 = vunpack.c.h.b16 %v666
    %v1026 = vunpack.c.l.b16 %v667
    %v1027 = vunpack.c.h.b16 %v667
    %v1028 = vunpack.c.l.b16 %v668
    %v1029 = vunpack.c.h.b16 %v668
    %v1030 = vunpack.c.l.b16 %v669
    %v1031 = vunpack.c.h.b16 %v669
    %v1032 = vunpack.c.l.b16 %v670
    %v1033 = vunpack.c.h.b16 %v670
    %v1034 = vunpack.c.l.b16 %v671
    %v1035 = vunpack.c.h.b16 %v671
    %v1036 = vunpack.c.l.b16 %v672
    %v1037 = vunpack.c.h.b16 %v672
    %v1038 = vunpack.c.l.b16 %v673
    %v1039 = vunpack.c.h.b16 %v673
    %v1040 = vunpack.c.l.b16 %v674
    %v1041 = vunpack.c.h.b16 %v674
    %v1042 = vunpack.c.l.b16 %v675
    %v1043 = vunpack.c.h.b16 %v675
    %v1044 = vunpack.c.l.b16 %v676
    %v1045 = vunpack.c.h.b16 %v676
    %v1046 = vunpack.c.l.b16 %v677
    %v1047 = vunpack.c.h.b16 %v677
    %v1048 = vunpack.c.l.b16 %v678
    %v1049 = vunpack.c.h.b16 %v678
    %v1050 = vunpack.c.l.b16 %v679
    %v1051 = vunpack.c.h.b16 %v679
    %v1052 = vunpack.c.l.b16 %v680
    %v1053 = vunpack.c.h.b16 %v680
    %v1054 = vunpack.c.l.b16 %v681
    %v1055 = vunpack.c.h.b16 %v681
    %v1056 = vunpack.c.l.b16 %v682
    %v1057 = vunpack.c.h.b16 %v682
    %v1058 = vunpack.c.l.b16 %v683
    %v1059 = vunpack.c.h.b16 %v683
    %v1060 = vunpack.c.l.b16 %v684
    %v1061 = vunpack.c.h.b16 %v684
    %v1062 = vunpack.c.l.b16 %v685
    %v1063 = vunpack.c.h.b16 %v685
    %v1064 = vunpack.c.l.b16 %v686
    %v1065 = vunpack.c.h.b16 %v686
    %v1066 = vunpack.c.l.b16 %v687
    %v1067 = vunpack.c.h.b16 %v687
    %v1068 = vunpack.c.l.b16 %v688
    %v1069 = vunpack.c.h.b16 %v688
    %v1070 = vunpack.c.l.b16 %v689
    %v1071 = vunpack.c.h.b16 %v689
    %v1072 = vunpack.c.l.b16 %v690
    %v1073 = vunpack.c.h.b16 %v690
    %v1074 = vunpack.c.l.b16 %v691
    %v1075 = vunpack.c.h.b16 %v691
    %v1076 = vunpack.c.l.b16 %v692
    %v1077 = vunpack.c.h.b16 %v692
    %v1078 = vunpack.c.l.b16 %v693
    %v1079 = vunpack.c.h.b16 %v693
    %v1080 = vunpack.c.l.b16 %v694
    %v1081 = vunpack.c.h.b16 %v694
    %v1082 = vunpack.c.l.b16 %v695
    %v1083 = vunpack.c.h.b16 %v695
    %v1084 = vunpack.c.l.b16 %v696
    %v1085 = vunpack.c.h.b16 %v696
    %v1086 = vunpack.c.l.b16 %v697
    %v1087 = vunpack.c.h.b16 %v697
    %v1088 = vunpack.c.l.b16 %v698
    %v1089 = vunpack.c.h.b16 %v698
    %v1090 = vunpack.c.l.b16 %v699
    %v1091 = vunpack.c.h.b16 %v699
    %v1092 = vunpack.c.l.b16 %v700
    %v1093 = vunpack.c.h.b16 %v700
    %v1094 = vunpack.c.l.b16 %v701
    %v1095 = vunpack.c.h.b16 %v701
    %v1096 = vpack.c.b16 %v844, %v840
    %v1097 = vpack.c.b16 %v845, %v841
    %v1098 = vpack.c.b16 %v846, %v842
    %v1099 = vpack.c.b16 %v847, %v843
    %v1100 = vpack.c.b16 %v852, %v848
    %v1101 = vpack.c.b16 %v853, %v849
    %v1102 = vpack.c.b16 %v854, %v850
    %v1103 = vpack.c.b16 %v855, %v851
    %v1104 = vpack.c.b16 %v860, %v856
    %v1105 = vpack.c.b16 %v861, %v857
    %v1106 = vpack.c.b16 %v862, %v858
    %v1107 = vpack.c.b16 %v863, %v859
    %v1108 = vpack.c.b16 %v868, %v864
    %v1109 = vpack.c.b16 %v869, %v865
    %v1110 = vpack.c.b16 %v870, %v866
    %v1111 = vpack.c.b16 %v871, %v867
    %v1112 = vpack.c.b16 %v876, %v872
    %v1113 = vpack.c.b16 %v877, %v873
    %v1114 = vpack.c.b16 %v878, %v874
    %v1115 = vpack.c.b16 %v879, %v875
    %v1116 = vpack.c.b16 %v884, %v880
    %v1117 = vpack.c.b16 %v885, %v881
    %v1118 = vpack.c.b16 %v886, %v882
    %v1119 = vpack.c.b16 %v887, %v883
    %v1120 = vpack.c.b16 %v892, %v888
    %v1121 = vpack.c.b16 %v893, %v889
    %v1122 = vpack.c.b16 %v894, %v890
    %v1123 = vpack.c.b16 %v895, %v891
    %v1124 = vpack.c.b16 %v900, %v896
    %v1125 = vpack.c.b16 %v901, %v897
    %v1126 = vpack.c.b16 %v902, %v898
    %v1127 = vpack.c.b16 %v903, %v899
    %v1128 = vpack.c.b16 %v908, %v904
    %v1129 = vpack.c.b16 %v909, %v905
    %v1130 = vpack.c.b16 %v910, %v906
    %v1131 = vpack.c.b16 %v911, %v907
    %v1132 = vpack.c.b16 %v916, %v912
    %v1133 = vpack.c.b16 %v917, %v913
    %v1134 = vpack.c.b16 %v918, %v914
    %v1135 = vpack.c.b16 %v919, %v915
    %v1136 = vpack.c.b16 %v924, %v920
    %v1137 = vpack.c.b16 %v925, %v921
    %v1138 = vpack.c.b16 %v926, %v922
    %v1139 = vpack.c.b16 %v927, %v923
    %v1140 = vpack.c.b16 %v932, %v928
    %v1141 = vpack.c.b16 %v933, %v929
    %v1142 = vpack.c.b16 %v934, %v930
    %v1143 = vpack.c.b16 %v935, %v931
    %v1144 = vpack.c.b16 %v940, %v936
    %v1145 = vpack.c.b16 %v941, %v937
    %v1146 = vpack.c.b16 %v942, %v938
    %v1147 = vpack.c.b16 %v943, %v939
    %v1148 = vpack.c.b16 %v948, %v944
    %v1149 = vpack.c.b16 %v949, %v945
    %v1150 = vpack.c.b16 %v950, %v946
    %v1151 = vpack.c.b16 %v951, %v947
    %v1152 = vpack.c.b16 %v956, %v952
    %v1153 = vpack.c.b16 %v957, %v953
    %v1154 = vpack.c.b16 %v958, %v954
    %v1155 = vpack.c.b16 %v959, %v955
    %v1156 = vpack.c.b16 %v964, %v960
    %v1157 = vpack.c.b16 %v965, %v961
    %v1158 = vpack.c.b16 %v966, %v962
    %v1159 = vpack.c.b16 %v967, %v963
    %v1160 = vpack.c.b16 %v972, %v968
    %v1161 = vpack.c.b16 %v973, %v969
    %v1162 = vpack.c.b16 %v974, %v970
    %v1163 = vpack.c.b16 %v975, %v971
    %v1164 = vpack.c.b16 %v980, %v976
    %v1165 = vpack.c.b16 %v981, %v977
    %v1166 = vpack.c.b16 %v982, %v978
    %v1167 = vpack.c.b16 %v983, %v979
    %v1168 = vpack.c.b16 %v988, %v984
    %v1169 = vpack.c.b16 %v989, %v985
    %v1170 = vpack.c.b16 %v990, %v986
    %v1171 = vpack.c.b16 %v991, %v987
    %v1172 = vpack.c.b16 %v996, %v992
    %v1173 = vpack.c.b16 %v997, %v993
    %v1174 = vpack.c.b16 %v998, %v994
    %v1175 = vpack.c.b16 %v999, %v995
    %v1176 = vpack.c.b16 %v1004, %v1000
    %v1177 = vpack.c.b16 %v1005, %v1001
    %v1178 = vpack.c.b16 %v1006, %v1002
    %v1179 = vpack.c.b16 %v1007, %v1003
    %v1180 = vpack.c.b16 %v1012, %v1008
    %v1181 = vpack.c.b16 %v1013, %v1009
    %v1182 = vpack.c.b16 %v1014, %v1010
    %v1183 = vpack.c.b16 %v1015, %v1011
    %v1184 = vpack.c.b16 %v1020, %v1016
    %v1185 = vpack.c.b16 %v1021, %v1017
    %v1186 = vpack.c.b16 %v1022, %v1018
    %v1187 = vpack.c.b16 %v1023, %v1019
    %v1188 = vpack.c.b16 %v1028, %v1024
    %v1189 = vpack.c.b16 %v1029, %v1025
    %v1190 = vpack.c.b16 %v1030, %v1026
    %v1191 = vpack.c.b16 %v1031, %v1027
    %v1192 = vpack.c.b16 %v1036, %v1032
    %v1193 = vpack.c.b16 %v1037, %v1033
    %v1194 = vpack.c.b16 %v1038, %v1034
    %v1195 = vpack.c.b16 %v1039, %v1035
    %v1196 = vpack.c.b16 %v1044, %v1040
    %v1197 = vpack.c.b16 %v1045, %v1041
    %v1198 = vpack.c.b16 %v1046, %v1042
    %v1199 = vpack.c.b16 %v1047, %v1043
    %v1200 = vpack.c.b16 %v1052, %v1048
    %v1201 = vpack.c.b16 %v1053, %v1049
    %v1202 = vpack.c.b16 %v1054, %v1050
    %v1203 = vpack.c.b16 %v1055, %v1051
    %v1204 = vpack.c.b16 %v1060, %v1056
    %v1205 = vpack.c.b16 %v1061, %v1057
    %v1206 = vpack.c.b16 %v1062, %v1058
    %v1207 = vpack.c.b16 %v1063, %v1059
    %v1208 = vpack.c.b16 %v1068, %v1064
    %v1209 = vpack.c.b16 %v1069, %v1065
    %v1210 = vpack.c.b16 %v1070, %v1066
    %v1211 = vpack.c.b16 %v1071, %v1067
    %v1212 = vpack.c.b16 %v1076, %v1072
    %v1213 = vpack.c.b16 %v1077, %v1073
    %v1214 = vpack.c.b16 %v1078, %v1074
    %v1215 = vpack.c.b16 %v1079, %v1075
    %v1216 = vpack.c.b16 %v1084, %v1080
    %v1217 = vpack.c.b16 %v1085, %v1081
    %v1218 = vpack.c.b16 %v1086, %v1082
    %v1219 = vpack.c.b16 %v1087, %v1083
    %v1220 = vpack.c.b16 %v1092, %v1088
    %v1221 = vpack.c.b16 %v1093, %v1089
    %v1222 = vpack.c.b16 %v1094, %v1090
    %v1223 = vpack.c.b16 %v1095, %v1091
    %1352 = vmatpush.bf16.msra.mxu0 %v1124
    %1353 = vmatpush.bf16.msra.mxu0 %v1120
    %1354 = vmatpush.bf16.msra.mxu0 %v1116
    %1355 = vmatpush.bf16.msra.mxu0 %v1112
    %1356 = vmatpush.bf16.msra.mxu0 %v1108
    %1357 = vmatpush.bf16.msra.mxu0 %v1104
    %1358 = vmatpush.bf16.msra.mxu0 %v1100
    %1359 = vmatpush.bf16.msra.mxu0 %v1096
    %1360 = vmatmul.bf16.gmra.mxu0 %v570
    %v1361 = vpop.f32.mrf.mxu0
    %v1362 = vadd.f32 %v704, %v1361
    %v1363 = vpop.f32.mrf.mxu0
    %1364 = vdwg.mxu0
    %1365 = vmatpush.bf16.msra.mxu0 %v1156
    %1366 = vmatpush.bf16.msra.mxu0 %v1152
    %1367 = vmatpush.bf16.msra.mxu0 %v1148
    %1368 = vmatpush.bf16.msra.mxu0 %v1144
    %1369 = vmatpush.bf16.msra.mxu0 %v1140
    %1370 = vmatpush.bf16.msra.mxu0 %v1136
    %1371 = vmatpush.bf16.msra.mxu0 %v1132
    %1372 = vmatpush.bf16.msra.mxu0 %v1128
    %1373 = vmatmul.bf16.gmra.mxu0 %v571
    %v1374 = vpop.f32.mrf.mxu0
    %v1375 = vadd.f32 %v1362, %v1374
    %v1376 = vpop.f32.mrf.mxu0
    %1377 = vdwg.mxu0
    %1378 = vmatpush.bf16.msra.mxu0 %v1188
    %1379 = vmatpush.bf16.msra.mxu0 %v1184
    %1380 = vmatpush.bf16.msra.mxu0 %v1180
    %1381 = vmatpush.bf16.msra.mxu0 %v1176
    %1382 = vmatpush.bf16.msra.mxu0 %v1172
    %1383 = vmatpush.bf16.msra.mxu0 %v1168
    %1384 = vmatpush.bf16.msra.mxu0 %v1164
    %1385 = vmatpush.bf16.msra.mxu0 %v1160
    %1386 = vmatmul.bf16.gmra.mxu0 %v572
    %v1387 = vpop.f32.mrf.mxu0
    %v1388 = vadd.f32 %v1375, %v1387
    %v1389 = vpop.f32.mrf.mxu0
    %1390 = vdwg.mxu0
    %1391 = vmatpush.bf16.msra.mxu0 %v1220
    %1392 = vmatpush.bf16.msra.mxu0 %v1216
    %1393 = vmatpush.bf16.msra.mxu0 %v1212
    %1394 = vmatpush.bf16.msra.mxu0 %v1208
    %1395 = vmatpush.bf16.msra.mxu0 %v1204
    %1396 = vmatpush.bf16.msra.mxu0 %v1200
    %1397 = vmatpush.bf16.msra.mxu0 %v1196
    %1398 = vmatpush.bf16.msra.mxu0 %v1192
    %1399 = vmatmul.bf16.gmra.mxu0 %v573
    %v1400 = vpop.f32.mrf.mxu0
    %v1401 = vadd.f32 %v1388, %v1400
    %v1402 = vpop.f32.mrf.mxu0
    %1403 = vdwg.mxu0
    %1404 = vmatpush.bf16.msra.mxu0 %v1125
    %1405 = vmatpush.bf16.msra.mxu0 %v1121
    %1406 = vmatpush.bf16.msra.mxu0 %v1117
    %1407 = vmatpush.bf16.msra.mxu0 %v1113
    %1408 = vmatpush.bf16.msra.mxu0 %v1109
    %1409 = vmatpush.bf16.msra.mxu0 %v1105
    %1410 = vmatpush.bf16.msra.mxu0 %v1101
    %1411 = vmatpush.bf16.msra.mxu0 %v1097
    %1412 = vmatmul.bf16.gmra.mxu0 %v570
    %v1413 = vpop.f32.mrf.mxu0
    %v1414 = vadd.f32 %v705, %v1413
    %v1415 = vpop.f32.mrf.mxu0
    %1416 = vdwg.mxu0
    %1417 = vmatpush.bf16.msra.mxu0 %v1157
    %1418 = vmatpush.bf16.msra.mxu0 %v1153
    %1419 = vmatpush.bf16.msra.mxu0 %v1149
    %1420 = vmatpush.bf16.msra.mxu0 %v1145
    %1421 = vmatpush.bf16.msra.mxu0 %v1141
    %1422 = vmatpush.bf16.msra.mxu0 %v1137
    %1423 = vmatpush.bf16.msra.mxu0 %v1133
    %1424 = vmatpush.bf16.msra.mxu0 %v1129
    %1425 = vmatmul.bf16.gmra.mxu0 %v571
    %v1426 = vpop.f32.mrf.mxu0
    %v1427 = vadd.f32 %v1414, %v1426
    %v1428 = vpop.f32.mrf.mxu0
    %1429 = vdwg.mxu0
    %1430 = vmatpush.bf16.msra.mxu0 %v1189
    %1431 = vmatpush.bf16.msra.mxu0 %v1185
    %1432 = vmatpush.bf16.msra.mxu0 %v1181
    %1433 = vmatpush.bf16.msra.mxu0 %v1177
    %1434 = vmatpush.bf16.msra.mxu0 %v1173
    %1435 = vmatpush.bf16.msra.mxu0 %v1169
    %1436 = vmatpush.bf16.msra.mxu0 %v1165
    %1437 = vmatpush.bf16.msra.mxu0 %v1161
    %1438 = vmatmul.bf16.gmra.mxu0 %v572
    %v1439 = vpop.f32.mrf.mxu0
    %v1440 = vadd.f32 %v1427, %v1439
    %v1441 = vpop.f32.mrf.mxu0
    %1442 = vdwg.mxu0
    %1443 = vmatpush.bf16.msra.mxu0 %v1221
    %1444 = vmatpush.bf16.msra.mxu0 %v1217
    %1445 = vmatpush.bf16.msra.mxu0 %v1213
    %1446 = vmatpush.bf16.msra.mxu0 %v1209
    %1447 = vmatpush.bf16.msra.mxu0 %v1205
    %1448 = vmatpush.bf16.msra.mxu0 %v1201
    %1449 = vmatpush.bf16.msra.mxu0 %v1197
    %1450 = vmatpush.bf16.msra.mxu0 %v1193
    %1451 = vmatmul.bf16.gmra.mxu0 %v573
    %v1452 = vpop.f32.mrf.mxu0
    %v1453 = vadd.f32 %v1440, %v1452
    %v1454 = vpop.f32.mrf.mxu0
    %1455 = vdwg.mxu0
    %1456 = vmatpush.bf16.msra.mxu0 %v1126
    %1457 = vmatpush.bf16.msra.mxu0 %v1122
    %1458 = vmatpush.bf16.msra.mxu0 %v1118
    %1459 = vmatpush.bf16.msra.mxu0 %v1114
    %1460 = vmatpush.bf16.msra.mxu0 %v1110
    %1461 = vmatpush.bf16.msra.mxu0 %v1106
    %1462 = vmatpush.bf16.msra.mxu0 %v1102
    %1463 = vmatpush.bf16.msra.mxu0 %v1098
    %1464 = vmatmul.bf16.gmra.mxu0 %v570
    %v1465 = vpop.f32.mrf.mxu0
    %v1466 = vadd.f32 %v706, %v1465
    %v1467 = vpop.f32.mrf.mxu0
    %1468 = vdwg.mxu0
    %1469 = vmatpush.bf16.msra.mxu0 %v1158
    %1470 = vmatpush.bf16.msra.mxu0 %v1154
    %1471 = vmatpush.bf16.msra.mxu0 %v1150
    %1472 = vmatpush.bf16.msra.mxu0 %v1146
    %1473 = vmatpush.bf16.msra.mxu0 %v1142
    %1474 = vmatpush.bf16.msra.mxu0 %v1138
    %1475 = vmatpush.bf16.msra.mxu0 %v1134
    %1476 = vmatpush.bf16.msra.mxu0 %v1130
    %1477 = vmatmul.bf16.gmra.mxu0 %v571
    %v1478 = vpop.f32.mrf.mxu0
    %v1479 = vadd.f32 %v1466, %v1478
    %v1480 = vpop.f32.mrf.mxu0
    %1481 = vdwg.mxu0
    %1482 = vmatpush.bf16.msra.mxu0 %v1190
    %1483 = vmatpush.bf16.msra.mxu0 %v1186
    %1484 = vmatpush.bf16.msra.mxu0 %v1182
    %1485 = vmatpush.bf16.msra.mxu0 %v1178
    %1486 = vmatpush.bf16.msra.mxu0 %v1174
    %1487 = vmatpush.bf16.msra.mxu0 %v1170
    %1488 = vmatpush.bf16.msra.mxu0 %v1166
    %1489 = vmatpush.bf16.msra.mxu0 %v1162
    %1490 = vmatmul.bf16.gmra.mxu0 %v572
    %v1491 = vpop.f32.mrf.mxu0
    %v1492 = vadd.f32 %v1479, %v1491
    %v1493 = vpop.f32.mrf.mxu0
    %1494 = vdwg.mxu0
    %1495 = vmatpush.bf16.msra.mxu0 %v1222
    %1496 = vmatpush.bf16.msra.mxu0 %v1218
    %1497 = vmatpush.bf16.msra.mxu0 %v1214
    %1498 = vmatpush.bf16.msra.mxu0 %v1210
    %1499 = vmatpush.bf16.msra.mxu0 %v1206
    %1500 = vmatpush.bf16.msra.mxu0 %v1202
    %1501 = vmatpush.bf16.msra.mxu0 %v1198
    %1502 = vmatpush.bf16.msra.mxu0 %v1194
    %1503 = vmatmul.bf16.gmra.mxu0 %v573
    %v1504 = vpop.f32.mrf.mxu0
    %v1505 = vadd.f32 %v1492, %v1504
    %v1506 = vpop.f32.mrf.mxu0
    %1507 = vdwg.mxu0
    %1508 = vmatpush.bf16.msra.mxu0 %v1127
    %1509 = vmatpush.bf16.msra.mxu0 %v1123
    %1510 = vmatpush.bf16.msra.mxu0 %v1119
    %1511 = vmatpush.bf16.msra.mxu0 %v1115
    %1512 = vmatpush.bf16.msra.mxu0 %v1111
    %1513 = vmatpush.bf16.msra.mxu0 %v1107
    %1514 = vmatpush.bf16.msra.mxu0 %v1103
    %1515 = vmatpush.bf16.msra.mxu0 %v1099
    %1516 = vmatmul.bf16.gmra.mxu0 %v570
    %v1517 = vpop.f32.mrf.mxu0
    %v1518 = vadd.f32 %v707, %v1517
    %v1519 = vpop.f32.mrf.mxu0
    %1520 = vdwg.mxu0
    %1521 = vmatpush.bf16.msra.mxu0 %v1159
    %1522 = vmatpush.bf16.msra.mxu0 %v1155
    %1523 = vmatpush.bf16.msra.mxu0 %v1151
    %1524 = vmatpush.bf16.msra.mxu0 %v1147
    %1525 = vmatpush.bf16.msra.mxu0 %v1143
    %1526 = vmatpush.bf16.msra.mxu0 %v1139
    %1527 = vmatpush.bf16.msra.mxu0 %v1135
    %1528 = vmatpush.bf16.msra.mxu0 %v1131
    %1529 = vmatmul.bf16.gmra.mxu0 %v571
    %v1530 = vpop.f32.mrf.mxu0
    %v1531 = vadd.f32 %v1518, %v1530
    %v1532 = vpop.f32.mrf.mxu0
    %1533 = vdwg.mxu0
    %1534 = vmatpush.bf16.msra.mxu0 %v1191
    %1535 = vmatpush.bf16.msra.mxu0 %v1187
    %1536 = vmatpush.bf16.msra.mxu0 %v1183
    %1537 = vmatpush.bf16.msra.mxu0 %v1179
    %1538 = vmatpush.bf16.msra.mxu0 %v1175
    %1539 = vmatpush.bf16.msra.mxu0 %v1171
    %1540 = vmatpush.bf16.msra.mxu0 %v1167
    %1541 = vmatpush.bf16.msra.mxu0 %v1163
    %1542 = vmatmul.bf16.gmra.mxu0 %v572
    %v1543 = vpop.f32.mrf.mxu0
    %v1544 = vadd.f32 %v1531, %v1543
    %v1545 = vpop.f32.mrf.mxu0
    %1546 = vdwg.mxu0
    %1547 = vmatpush.bf16.msra.mxu0 %v1223
    %1548 = vmatpush.bf16.msra.mxu0 %v1219
    %1549 = vmatpush.bf16.msra.mxu0 %v1215
    %1550 = vmatpush.bf16.msra.mxu0 %v1211
    %1551 = vmatpush.bf16.msra.mxu0 %v1207
    %1552 = vmatpush.bf16.msra.mxu0 %v1203
    %1553 = vmatpush.bf16.msra.mxu0 %v1199
    %1554 = vmatpush.bf16.msra.mxu0 %v1195
    %1555 = vmatmul.bf16.gmra.mxu0 %v573
    %v1556 = vpop.f32.mrf.mxu0
    %v1557 = vadd.f32 %v1544, %v1556
    %v1558 = vpop.f32.mrf.mxu0
    %1559 = vdwg.mxu0
    %v1560 = vmax.f32 %v1401, 0.0
    %v1561 = vmax.f32 %v1453, 0.0
    %v1562 = vmax.f32 %v1505, 0.0
    %v1563 = vmax.f32 %v1557, 0.0
    %v1564 = vpack.c.bf16 %v1560, %v1560
    %v1565 = vpack.c.bf16 %v1561, %v1561
    %v1566 = vpack.c.bf16 %v1562, %v1562
    %v1567 = vpack.c.bf16 %v1563, %v1563
    %v1568 = vld [vmem:[%s5] sm:$0xf]
    %v1569 = vld [vmem:[%s5 + $0x4] sm:$0xf]
    %v1570 = vld [vmem:[%s5 + $0x8] sm:$0xf]
    %v1571 = vld [vmem:[%s5 + $0xc] sm:$0xf]
    %v1572 = vld [vmem:[%s5 + $0x10] sm:$0xf]
    %v1573 = vld [vmem:[%s5 + $0x14] sm:$0xf]
    %v1574 = vld [vmem:[%s5 + $0x18] sm:$0xf]
    %v1575 = vld [vmem:[%s5 + $0x1c] sm:$0xf]
    %v1576 = vld [vmem:[%s5 + $0x20] sm:$0xf]
    %v1577 = vld [vmem:[%s5 + $0x24] sm:$0xf]
    %v1578 = vld [vmem:[%s5 + $0x28] sm:$0xf]
    %v1579 = vld [vmem:[%s5 + $0x2c] sm:$0xf]
    %v1580 = vld [vmem:[%s5 + $0x30] sm:$0xf]
    %v1581 = vld [vmem:[%s5 + $0x34] sm:$0xf]
    %v1582 = vld [vmem:[%s5 + $0x38] sm:$0xf]
    %v1583 = vld [vmem:[%s5 + $0x3c] sm:$0xf]
    %v1584 = vld [vmem:[%s5 + $0x40] sm:$0xf]
    %v1585 = vld [vmem:[%s5 + $0x44] sm:$0xf]
    %v1586 = vld [vmem:[%s5 + $0x48] sm:$0xf]
    %v1587 = vld [vmem:[%s5 + $0x4c] sm:$0xf]
    %v1588 = vld [vmem:[%s5 + $0x50] sm:$0xf]
    %v1589 = vld [vmem:[%s5 + $0x54] sm:$0xf]
    %v1590 = vld [vmem:[%s5 + $0x58] sm:$0xf]
    %v1591 = vld [vmem:[%s5 + $0x5c] sm:$0xf]
    %v1592 = vld [vmem:[%s5 + $0x60] sm:$0xf]
    %v1593 = vld [vmem:[%s5 + $0x64] sm:$0xf]
    %v1594 = vld [vmem:[%s5 + $0x68] sm:$0xf]
    %v1595 = vld [vmem:[%s5 + $0x6c] sm:$0xf]
    %v1596 = vld [vmem:[%s5 + $0x70] sm:$0xf]
    %v1597 = vld [vmem:[%s5 + $0x74] sm:$0xf]
    %v1598 = vld [vmem:[%s5 + $0x78] sm:$0xf]
    %v1599 = vld [vmem:[%s5 + $0x7c] sm:$0xf]
    %v1600 = vld [vmem:[%s5 + $0x80] sm:$0xf]
    %v1601 = vld [vmem:[%s5 + $0x84] sm:$0xf]
    %v1602 = vld [vmem:[%s5 + $0x88] sm:$0xf]
    %v1603 = vld [vmem:[%s5 + $0x8c] sm:$0xf]
    %v1604 = vld [vmem:[%s5 + $0x90] sm:$0xf]
    %v1605 = vld [vmem:[%s5 + $0x94] sm:$0xf]
    %v1606 = vld [vmem:[%s5 + $0x98] sm:$0xf]
    %v1607 = vld [vmem:[%s5 + $0x9c] sm:$0xf]
    %v1608 = vld [vmem:[%s5 + $0xa0] sm:$0xf]
    %v1609 = vld [vmem:[%s5 + $0xa4] sm:$0xf]
    %v1610 = vld [vmem:[%s5 + $0xa8] sm:$0xf]
    %v1611 = vld [vmem:[%s5 + $0xac] sm:$0xf]
    %v1612 = vld [vmem:[%s5 + $0xb0] sm:$0xf]
    %v1613 = vld [vmem:[%s5 + $0xb4] sm:$0xf]
    %v1614 = vld [vmem:[%s5 + $0xb8] sm:$0xf]
    %v1615 = vld [vmem:[%s5 + $0xbc] sm:$0xf]
    %v1616 = vld [vmem:[%s5 + $0xc0] sm:$0xf]
    %v1617 = vld [vmem:[%s5 + $0xc4] sm:$0xf]
    %v1618 = vld [vmem:[%s5 + $0xc8] sm:$0xf]
    %v1619 = vld [vmem:[%s5 + $0xcc] sm:$0xf]
    %v1620 = vld [vmem:[%s5 + $0xd0] sm:$0xf]
    %v1621 = vld [vmem:[%s5 + $0xd4] sm:$0xf]
    %v1622 = vld [vmem:[%s5 + $0xd8] sm:$0xf]
    %v1623 = vld [vmem:[%s5 + $0xdc] sm:$0xf]
    %v1624 = vld [vmem:[%s5 + $0xe0] sm:$0xf]
    %v1625 = vld [vmem:[%s5 + $0xe4] sm:$0xf]
    %v1626 = vld [vmem:[%s5 + $0xe8] sm:$0xf]
    %v1627 = vld [vmem:[%s5 + $0xec] sm:$0xf]
    %v1628 = vld [vmem:[%s5 + $0xf0] sm:$0xf]
    %v1629 = vld [vmem:[%s5 + $0xf4] sm:$0xf]
    %v1630 = vld [vmem:[%s5 + $0xf8] sm:$0xf]
    %v1631 = vld [vmem:[%s5 + $0xfc] sm:$0xf]
    %v1632 = vld [vmem:[%s6] sm:$0x1]
    %v1634 = vperm.slane %v1632, 0
    %v1700 = vunpack.c.l.b16 %v1568
    %v1701 = vunpack.c.l.b16 %v1569
    %v1702 = vunpack.c.l.b16 %v1570
    %v1703 = vunpack.c.l.b16 %v1571
    %v1704 = vunpack.c.l.b16 %v1572
    %v1705 = vunpack.c.l.b16 %v1573
    %v1706 = vunpack.c.l.b16 %v1574
    %v1707 = vunpack.c.l.b16 %v1575
    %v1708 = vunpack.c.l.b16 %v1576
    %v1709 = vunpack.c.l.b16 %v1577
    %v1710 = vunpack.c.l.b16 %v1578
    %v1711 = vunpack.c.l.b16 %v1579
    %v1712 = vunpack.c.l.b16 %v1580
    %v1713 = vunpack.c.l.b16 %v1581
    %v1714 = vunpack.c.l.b16 %v1582
    %v1715 = vunpack.c.l.b16 %v1583
    %v1716 = vunpack.c.l.b16 %v1584
    %v1717 = vunpack.c.l.b16 %v1585
    %v1718 = vunpack.c.l.b16 %v1586
    %v1719 = vunpack.c.l.b16 %v1587
    %v1720 = vunpack.c.l.b16 %v1588
    %v1721 = vunpack.c.l.b16 %v1589
    %v1722 = vunpack.c.l.b16 %v1590
    %v1723 = vunpack.c.l.b16 %v1591
    %v1724 = vunpack.c.l.b16 %v1592
    %v1725 = vunpack.c.l.b16 %v1593
    %v1726 = vunpack.c.l.b16 %v1594
    %v1727 = vunpack.c.l.b16 %v1595
    %v1728 = vunpack.c.l.b16 %v1596
    %v1729 = vunpack.c.l.b16 %v1597
    %v1730 = vunpack.c.l.b16 %v1598
    %v1731 = vunpack.c.l.b16 %v1599
    %v1732 = vunpack.c.l.b16 %v1600
    %v1733 = vunpack.c.l.b16 %v1601
    %v1734 = vunpack.c.l.b16 %v1602
    %v1735 = vunpack.c.l.b16 %v1603
    %v1736 = vunpack.c.l.b16 %v1604
    %v1737 = vunpack.c.l.b16 %v1605
    %v1738 = vunpack.c.l.b16 %v1606
    %v1739 = vunpack.c.l.b16 %v1607
    %v1740 = vunpack.c.l.b16 %v1608
    %v1741 = vunpack.c.l.b16 %v1609
    %v1742 = vunpack.c.l.b16 %v1610
    %v1743 = vunpack.c.l.b16 %v1611
    %v1744 = vunpack.c.l.b16 %v1612
    %v1745 = vunpack.c.l.b16 %v1613
    %v1746 = vunpack.c.l.b16 %v1614
    %v1747 = vunpack.c.l.b16 %v1615
    %v1748 = vunpack.c.l.b16 %v1616
    %v1749 = vunpack.c.l.b16 %v1617
    %v1750 = vunpack.c.l.b16 %v1618
    %v1751 = vunpack.c.l.b16 %v1619
    %v1752 = vunpack.c.l.b16 %v1620
    %v1753 = vunpack.c.l.b16 %v1621
    %v1754 = vunpack.c.l.b16 %v1622
    %v1755 = vunpack.c.l.b16 %v1623
    %v1756 = vunpack.c.l.b16 %v1624
    %v1757 = vunpack.c.l.b16 %v1625
    %v1758 = vunpack.c.l.b16 %v1626
    %v1759 = vunpack.c.l.b16 %v1627
    %v1760 = vunpack.c.l.b16 %v1628
    %v1761 = vunpack.c.l.b16 %v1629
    %v1762 = vunpack.c.l.b16 %v1630
    %v1763 = vunpack.c.l.b16 %v1631
    %v1764 = vpack.c.b16 %v1701, %v1700
    %v1765 = vpack.c.b16 %v1703, %v1702
    %v1766 = vpack.c.b16 %v1705, %v1704
    %v1767 = vpack.c.b16 %v1707, %v1706
    %v1768 = vpack.c.b16 %v1709, %v1708
    %v1769 = vpack.c.b16 %v1711, %v1710
    %v1770 = vpack.c.b16 %v1713, %v1712
    %v1771 = vpack.c.b16 %v1715, %v1714
    %v1772 = vpack.c.b16 %v1717, %v1716
    %v1773 = vpack.c.b16 %v1719, %v1718
    %v1774 = vpack.c.b16 %v1721, %v1720
    %v1775 = vpack.c.b16 %v1723, %v1722
    %v1776 = vpack.c.b16 %v1725, %v1724
    %v1777 = vpack.c.b16 %v1727, %v1726
    %v1778 = vpack.c.b16 %v1729, %v1728
    %v1779 = vpack.c.b16 %v1731, %v1730
    %v1780 = vpack.c.b16 %v1733, %v1732
    %v1781 = vpack.c.b16 %v1735, %v1734
    %v1782 = vpack.c.b16 %v1737, %v1736
    %v1783 = vpack.c.b16 %v1739, %v1738
    %v1784 = vpack.c.b16 %v1741, %v1740
    %v1785 = vpack.c.b16 %v1743, %v1742
    %v1786 = vpack.c.b16 %v1745, %v1744
    %v1787 = vpack.c.b16 %v1747, %v1746
    %v1788 = vpack.c.b16 %v1749, %v1748
    %v1789 = vpack.c.b16 %v1751, %v1750
    %v1790 = vpack.c.b16 %v1753, %v1752
    %v1791 = vpack.c.b16 %v1755, %v1754
    %v1792 = vpack.c.b16 %v1757, %v1756
    %v1793 = vpack.c.b16 %v1759, %v1758
    %v1794 = vpack.c.b16 %v1761, %v1760
    %v1795 = vpack.c.b16 %v1763, %v1762
    %1828 = vmatpush.bf16.msra.mxu0 %v1771
    %1829 = vmatpush.bf16.msra.mxu0 %v1770
    %1830 = vmatpush.bf16.msra.mxu0 %v1769
    %1831 = vmatpush.bf16.msra.mxu0 %v1768
    %1832 = vmatpush.bf16.msra.mxu0 %v1767
    %1833 = vmatpush.bf16.msra.mxu0 %v1766
    %1834 = vmatpush.bf16.msra.mxu0 %v1765
    %1835 = vmatpush.bf16.msra.mxu0 %v1764
    %1836 = vmatmul.bf16.gmra.mxu0 %v1564
    %v1837 = vpop.f32.mrf.mxu0
    %v1838 = vadd.f32 %v1634, %v1837
    %v1839 = vpop.f32.mrf.mxu0
    %1840 = vdwg.mxu0
    %1841 = vmatpush.bf16.msra.mxu0 %v1779
    %1842 = vmatpush.bf16.msra.mxu0 %v1778
    %1843 = vmatpush.bf16.msra.mxu0 %v1777
    %1844 = vmatpush.bf16.msra.mxu0 %v1776
    %1845 = vmatpush.bf16.msra.mxu0 %v1775
    %1846 = vmatpush.bf16.msra.mxu0 %v1774
    %1847 = vmatpush.bf16.msra.mxu0 %v1773
    %1848 = vmatpush.bf16.msra.mxu0 %v1772
    %1849 = vmatmul.bf16.gmra.mxu0 %v1565
    %v1850 = vpop.f32.mrf.mxu0
    %v1851 = vadd.f32 %v1838, %v1850
    %v1852 = vpop.f32.mrf.mxu0
    %1853 = vdwg.mxu0
    %1854 = vmatpush.bf16.msra.mxu0 %v1787
    %1855 = vmatpush.bf16.msra.mxu0 %v1786
    %1856 = vmatpush.bf16.msra.mxu0 %v1785
    %1857 = vmatpush.bf16.msra.mxu0 %v1784
    %1858 = vmatpush.bf16.msra.mxu0 %v1783
    %1859 = vmatpush.bf16.msra.mxu0 %v1782
    %1860 = vmatpush.bf16.msra.mxu0 %v1781
    %1861 = vmatpush.bf16.msra.mxu0 %v1780
    %1862 = vmatmul.bf16.gmra.mxu0 %v1566
    %v1863 = vpop.f32.mrf.mxu0
    %v1864 = vadd.f32 %v1851, %v1863
    %v1865 = vpop.f32.mrf.mxu0
    %1866 = vdwg.mxu0
    %1867 = vmatpush.bf16.msra.mxu0 %v1795
    %1868 = vmatpush.bf16.msra.mxu0 %v1794
    %1869 = vmatpush.bf16.msra.mxu0 %v1793
    %1870 = vmatpush.bf16.msra.mxu0 %v1792
    %1871 = vmatpush.bf16.msra.mxu0 %v1791
    %1872 = vmatpush.bf16.msra.mxu0 %v1790
    %1873 = vmatpush.bf16.msra.mxu0 %v1789
    %1874 = vmatpush.bf16.msra.mxu0 %v1788
    %1875 = vmatmul.bf16.gmra.mxu0 %v1567
    %v1876 = vpop.f32.mrf.mxu0
    %v1877 = vadd.f32 %v1864, %v1876
    %v1878 = vpop.f32.mrf.mxu0
    %1879 = vdwg.mxu0
    %v1880 = vld [vmem:[%s7] sm:$0x1]
    %v1881 = vld [vmem:[%s8] sm:$0x1]
    %v1883 = vperm.slane %v1880, 0
    %v1885 = vmax.f32 %v1883, %v1877
    %v1887 = vperm.slane %v1881, 0
    %v1889 = vmin.f32 %v1887, %v1885
    %1890 = vst [vmem:[%s9] sm:$0xff] %v1889
    // Predicated region
    $region46: #{fcgp_forward.1} parent=1 // pred_check
      _
    $region47: #{fcgp_forward.1} parent=1 // pred_check_branch
      %1892 = sbr.rel (0) target = $region49
    $region48: #{fcgp_forward.1} parent=1 // pred_region
      _
    $region49: #{fcgp_forward.1} parent=1 // pred_fallthru
      _
    // Predicated region
    $region50: #{fcgp_forward.1} parent=1 // pred_check
      _
    $region51: #{fcgp_forward.1} parent=1 // pred_check_branch
      %1894 = sbr.rel (0) target = $region53
    $region52: #{fcgp_forward.1} parent=1 // pred_region
      _
    $region53: #{fcgp_forward.1} parent=1 // pred_fallthru
      _
    %1895 = vsyncpa [#allocation3], 1
    %1896 = vsyncpa [#allocation5], 1

</llo_original>
